<compile_context>
chip_gen: v7x
topology: tpu7x:2x2x1
jax: 0.10.0
libtpu: 0.0.40
codegen_flags: <defaults>
</compile_context>

<pallas_src>
import functools

import jax
import jax.numpy as jnp
import numpy as np
from jax.experimental import pallas as pl
from jax.experimental.pallas import tpu as pltpu

BETA_MIN = 0.1
BETA_MAX = 20.0


def vpode_kernel(tk_ref, y_ref, z_ref, w1_ref, w2_ref, b1_ref, o_ref,
                 h_acc, p_scr, *, beta_0, beta_1, n_cls_pad):
    """Two-phase grid (b, phase, k):
         phase 0: h_acc (TB, HID) += z_tile @ W1_tile^T    (f32 accumulation)
         phase 1: k==0 builds p = scale * relu'(h) * W2[y] (bf16 scratch),
                  every k emits o_tile = p @ W1_tile.

    tk_ref : (1, 1)          SMEM f32   ODE time t_k
    y_ref  : (TB, 1)         VMEM i32   labels (padded batch rows)
    z_ref  : (TB, tile_d)    VMEM bf16  flattened state tile (phase 0 only)
    w1_ref : (HID, tile_d)   VMEM bf16  first-layer weight tile
    w2_ref : (K_pad, HID)    VMEM bf16  full second-layer weight
    b1_ref : (1, HID)        VMEM f32   first-layer bias
    o_ref  : (TB, tile_d)    VMEM f32   dz/dt tile
    h_acc  : (TB, HID)       VMEM f32   scratch accumulator (includes b1)
    p_scr  : (TB, HID)       VMEM bf16  scratch holding scaled masked W2[y]
    """
    phase = pl.program_id(1)
    k = pl.program_id(2)

    @pl.when(phase == 0)
    def _accumulate_h():
        @pl.when(k == 0)
        def _init():
            # Initialise with the bias so h_acc == h after the last D tile.
            h_acc[...] = jnp.broadcast_to(b1_ref[...], h_acc.shape)

        # h += z_tile @ W1_tile^T  (contract this D tile; f32 accumulate).
        h_acc[...] += jax.lax.dot_general(
            z_ref[...], w1_ref[...], (((1,), (1,)), ((), ())),
            preferred_element_type=jnp.float32)

    @pl.when(phase == 1)
    def _emit_grad():
        @pl.when(k == 0)
        def _build_p():
            # In-kernel gather of W2[y] as a one-hot matmul on the MXU.
            y_col = y_ref[...]                                   # (TB, 1) i32
            cls = jax.lax.broadcasted_iota(
                jnp.int32, (y_col.shape[0], n_cls_pad), 1)       # (TB, K_pad)
            onehot = jnp.where(cls == y_col, 1.0, 0.0).astype(jnp.bfloat16)
            w2y = jnp.dot(onehot, w2_ref[...],
                          preferred_element_type=jnp.float32)    # (TB, HID)

            # beta_t / scale computed in-kernel; scale folded into the small
            # (TB, HID) slab instead of the full-width (TB, tile_d) result.
            beta_t = beta_0 + tk_ref[0, 0] * (beta_1 - beta_0)
            scale = -0.5 * beta_t
            h = h_acc[...]                                       # includes b1
            p_scr[...] = jnp.where(h > 0.0, scale * w2y,
                                   0.0).astype(jnp.bfloat16)

        # dz/dt tile = p @ W1_tile  -> (TB, tile_d), lane-dense f32 store.
        o_ref[...] = jnp.dot(p_scr[...], w1_ref[...],
                             preferred_element_type=jnp.float32)


def _round_up(x, m):
    return (x + m - 1) // m * m


def _choose_tb(B):
    """Batch tile: single block up to 256 rows (16-row bf16 packing),
    otherwise 128-row tiles."""
    if B <= 256:
        return _round_up(max(B, 16), 16)
    return 128


def _choose_tile_d(D, HID, itemsize=2, budget_bytes=8 * 1024 * 1024):
    """Largest D tile (multiple of 128, dividing D) whose W1 slab fits budget.

    If the whole W1 fits, tile_d == D: its block index is then constant over
    the grid, so the weight is DMA'd exactly once per call.
    """
    if HID * D * itemsize <= budget_bytes:
        return D
    t = max(128, min(D, (budget_bytes // (HID * itemsize)) // 128 * 128))
    while D % t:
        t -= 128
    return max(t, 128)


def vpode_forward(t_k, z, y, params, beta_0=BETA_MIN, beta_1=BETA_MAX,
                  tile_d=None):
    """JAX wrapper reproducing VPODE.forward(t_k, states) -> dz_dt."""
    W1, b1, W2, _b2 = params           # b2 does not affect d(energy)/dz
    B = z.shape[0]
    HID, D = W1.shape
    assert D % 128 == 0 and HID % 128 == 0, "synthetic ccf dims must be lane-aligned"

    TB = _choose_tb(B)
    B_pad = _round_up(B, TB)
    nb = B_pad // TB

    if tile_d is None:
        tile_d = _choose_tile_d(D, HID)
    assert D % tile_d == 0 and tile_d % 128 == 0
    nk = D // tile_d

    # ---- wrapper-side layout / dtype prep (cheap, one-off per call) --------
    z_flat = z.reshape(B, D)
    if B_pad != B:
        z_flat = jnp.pad(z_flat, ((0, B_pad - B), (0, 0)))
        y = jnp.pad(y, (0, B_pad - B))
    z_bf = z_flat.astype(jnp.bfloat16)
    w1_bf = W1.astype(jnp.bfloat16)

    K = W2.shape[0]
    K_pad = _round_up(K, 16)           # bf16 sublane packing
    w2_bf = W2.astype(jnp.bfloat16)
    if K_pad != K:
        w2_bf = jnp.pad(w2_bf, ((0, K_pad - K), (0, 0)))

    y_col = y.reshape(B_pad, 1).astype(jnp.int32)
    b1_2d = b1.reshape(1, HID).astype(jnp.float32)
    tk_sc = jnp.asarray(t_k, jnp.float32).reshape(1, 1)

    kernel = functools.partial(vpode_kernel, beta_0=float(beta_0),
                               beta_1=float(beta_1), n_cls_pad=K_pad)

    out = pl.pallas_call(
        kernel,
        out_shape=jax.ShapeDtypeStruct((B_pad, D), jnp.float32),
        grid_spec=pltpu.PrefetchScalarGridSpec(
            num_scalar_prefetch=0,
            grid=(nb, 2, nk),          # (batch block, phase, D tile)
            in_specs=[
                pl.BlockSpec((1, 1), lambda b, ph, k: (0, 0),
                             memory_space=pltpu.MemorySpace.SMEM),     # t_k
                pl.BlockSpec((TB, 1), lambda b, ph, k: (b, 0)),        # y
                # z is only read in phase 0; pin its block index in phase 1 so
                # it is streamed from HBM exactly once.
                pl.BlockSpec((TB, tile_d),
                             lambda b, ph, k: (b, k * (1 - ph))),      # z
                pl.BlockSpec((HID, tile_d), lambda b, ph, k: (0, k)),  # W1
                pl.BlockSpec((K_pad, HID), lambda b, ph, k: (0, 0)),   # W2
                pl.BlockSpec((1, HID), lambda b, ph, k: (0, 0)),       # b1
            ],
            # During phase 0 the output block index is pinned to (b, 0), so no
            # stale block is written back before phase 1 fills it; each output
            # block gets exactly one (lane-dense, unmasked) HBM writeback.
            out_specs=pl.BlockSpec((TB, tile_d), lambda b, ph, k: (b, k * ph)),
            scratch_shapes=[pltpu.VMEM((TB, HID), jnp.float32),        # h acc
                            pltpu.VMEM((TB, HID), jnp.bfloat16)],      # p
        ),
        compiler_params=pltpu.CompilerParams(
            dimension_semantics=("parallel", "arbitrary", "arbitrary"),
            vmem_limit_bytes=32 * 1024 * 1024,
        ),
    )(tk_sc, y_col, z_bf, w1_bf, w2_bf, b1_2d)

    return out[:B].reshape(z.shape)


def _reference(t_k, z, y, params, beta_0=BETA_MIN, beta_1=BETA_MAX):
    """Autodiff reference (mirrors the torch.autograd.grad path), computed with
    the same numerics as the kernel: bf16 matmul inputs, f32 accumulation.
    (A pure-f32 reference can flip relu'(h) for |h| within bf16 rounding noise,
    which is a property of the quantization, not of the kernel.)"""
    W1, b1, W2, b2 = params
    B = z.shape[0]
    D = W1.shape[1]
    z_flat = z.reshape(B, D).astype(jnp.float32)
    w1_bf = W1.astype(jnp.bfloat16)
    w2_bf = W2.astype(jnp.bfloat16)

    def cond_energy_sum(zf):
        h = jax.lax.dot_general(zf.astype(jnp.bfloat16), w1_bf,
                                (((1,), (1,)), ((), ())),
                                preferred_element_type=jnp.float32) + b1
        hr = jnp.maximum(h, 0.0)
        logits = jax.lax.dot_general(hr.astype(jnp.bfloat16), w2_bf,
                                     (((1,), (1,)), ((), ())),
                                     preferred_element_type=jnp.float32) + b2
        return logits[jnp.arange(B), y].sum()

    grad = jax.grad(cond_energy_sum)(z_flat)
    beta_t = beta_0 + t_k * (beta_1 - beta_0)
    return (-0.5 * beta_t * grad).reshape(z.shape)


if __name__ == "__main__":
    # Small shapes consistent with an image-like ODE state.
    B, C, H, W = 2, 4, 16, 16
    D = C * H * W                      # 1024
    HID = 128                          # hidden width of synthetic ccf
    K = 10                             # number of classes

    key = jax.random.PRNGKey(0)
    kz, ky, k1, k2, k3, k4 = jax.random.split(key, 6)

    z = jax.random.normal(kz, (B, C, H, W), dtype=jnp.float32)
    y = jax.random.randint(ky, (B,), 0, K, dtype=jnp.int32)

    # Deterministic synthetic ccf parameters.
    # TODO(synk): the real `ccf` is an arbitrary external torch classifier;
    # here its conditional-energy head is a fixed 2-layer MLP whose z-gradient
    # is computed analytically in-kernel.
    W1 = 0.02 * jax.random.normal(k1, (HID, D), dtype=jnp.float32)
    b1 = 0.01 * jax.random.normal(k2, (HID,), dtype=jnp.float32)
    W2 = 0.02 * jax.random.normal(k3, (K, HID), dtype=jnp.float32)
    b2 = 0.01 * jax.random.normal(k4, (K,), dtype=jnp.float32)
    params = (W1, b1, W2, b2)

    t_k = jnp.float32(0.5)

    ref = jax.block_until_ready(_reference(t_k, z, y, params))

    # Default config: W1 fits VMEM -> tile_d == D (W1 DMA'd exactly once).
    dz_dt = jax.block_until_ready(vpode_forward(t_k, z, y, params))
    np.testing.assert_allclose(np.asarray(dz_dt), np.asarray(ref),
                               rtol=5e-2, atol=5e-4)
    assert dz_dt.shape == z.shape and dz_dt.dtype == jnp.float32

    # Streamed config: exercise the two-phase D-tiled path (nk = 4).
    dz_dt_tiled = jax.block_until_ready(
        vpode_forward(t_k, z, y, params, tile_d=256))
    np.testing.assert_allclose(np.asarray(dz_dt_tiled), np.asarray(ref),
                               rtol=5e-2, atol=5e-4)

    print("KERNEL_OK")
</pallas_src>

<mosaic_0001>
module attributes {stable_mosaic.version = 11 : i64} {
  func.func @vpode_kernel(%arg0: i32, %arg1: i32, %arg2: i32, %arg3: memref<1x1xf32, #tpu.memory_space<smem>>, %arg4: memref<16x1xi32, #tpu.memory_space<vmem>>, %arg5: memref<16x1024xbf16, #tpu.memory_space<vmem>>, %arg6: memref<128x1024xbf16, #tpu.memory_space<vmem>>, %arg7: memref<16x128xbf16, #tpu.memory_space<vmem>>, %arg8: memref<1x128xf32, #tpu.memory_space<vmem>>, %arg9: memref<16x1024xf32, #tpu.memory_space<vmem>>, %arg10: memref<16x128xf32, #tpu.memory_space<vmem>>, %arg11: memref<16x128xbf16, #tpu.memory_space<vmem>>) attributes {dimension_semantics = [#tpu.dimension_semantics<parallel>, #tpu.dimension_semantics<arbitrary>, #tpu.dimension_semantics<arbitrary>], iteration_bounds = array<i64: 1, 2, 1>, scalar_prefetch = 0 : i64, scratch_operands = 2 : i64, tpu.core_type = #tpu.core_type<tc>, window_params = [{transform_indices = @transform_0, window_bounds = array<i64: 1, 1>}, {transform_indices = @transform_1, window_bounds = array<i64: 16, 1>}, {transform_indices = @transform_2, window_bounds = array<i64: 16, 1024>}, {transform_indices = @transform_3, window_bounds = array<i64: 128, 1024>}, {pipeline_mode = #tpu.pipeline_mode<synchronous>, transform_indices = @transform_4, window_bounds = array<i64: 16, 128>}, {pipeline_mode = #tpu.pipeline_mode<synchronous>, transform_indices = @transform_5, window_bounds = array<i64: 1, 128>}, {transform_indices = @transform_6, window_bounds = array<i64: 16, 1024>}]} {
    %c0_i32 = arith.constant 0 : i32
    %0 = arith.cmpi eq, %arg1, %c0_i32 : i32
    %1 = arith.extui %0 : i1 to i32
    %c0_i32_0 = arith.constant 0 : i32
    %2 = arith.cmpi ne, %1, %c0_i32_0 : i32
    scf.if %2 {
      %c0_i32_2 = arith.constant 0 : i32
      %6 = arith.cmpi eq, %arg2, %c0_i32_2 : i32
      %7 = arith.extui %6 : i1 to i32
      %c0_i32_3 = arith.constant 0 : i32
      %8 = arith.cmpi ne, %7, %c0_i32_3 : i32
      scf.if %8 {
        %c0_11 = arith.constant 0 : index
        %c0_12 = arith.constant 0 : index
        %15 = vector.load %arg8[%c0_11, %c0_12] : memref<1x128xf32, #tpu.memory_space<vmem>>, vector<1x128xf32>
        %16 = vector.shape_cast %15 : vector<1x128xf32> to vector<1x128xf32>
        %17 = vector.broadcast %16 : vector<1x128xf32> to vector<16x128xf32>
        %c0_13 = arith.constant 0 : index
        %c0_14 = arith.constant 0 : index
        %18 = vector.load %arg10[%c0_13, %c0_14] : memref<16x128xf32, #tpu.memory_space<vmem>>, vector<16x128xf32>
        tpu.vector_store %arg10[%c0_13, %c0_14], %17 {strides = array<i32>} : memref<16x128xf32, #tpu.memory_space<vmem>>, vector<16x128xf32>,
      } else {
      }
      %c0 = arith.constant 0 : index
      %c0_4 = arith.constant 0 : index
      %9 = vector.load %arg10[%c0, %c0_4] : memref<16x128xf32, #tpu.memory_space<vmem>>, vector<16x128xf32>
      %c0_5 = arith.constant 0 : index
      %c0_6 = arith.constant 0 : index
      %10 = vector.load %arg5[%c0_5, %c0_6] : memref<16x1024xbf16, #tpu.memory_space<vmem>>, vector<16x1024xbf16>
      %c0_7 = arith.constant 0 : index
      %c0_8 = arith.constant 0 : index
      %11 = vector.load %arg6[%c0_7, %c0_8] : memref<128x1024xbf16, #tpu.memory_space<vmem>>, vector<128x1024xbf16>
      %cst = arith.constant dense<0.000000e+00> : vector<16x128xf32>
      %12 = tpu.matmul %10, %11, %cst {dimension_numbers = #tpu.dot_dimension_numbers<[1], [1], [0], [0], [0, 0, 1, 0], [], []>} : vector<16x1024xbf16>, vector<128x1024xbf16>, vector<16x128xf32> -> vector<16x128xf32>
      %13 = arith.addf %9, %12 : vector<16x128xf32>
      %c0_9 = arith.constant 0 : index
      %c0_10 = arith.constant 0 : index
      %14 = vector.load %arg10[%c0_9, %c0_10] : memref<16x128xf32, #tpu.memory_space<vmem>>, vector<16x128xf32>
      tpu.vector_store %arg10[%c0_9, %c0_10], %13 {strides = array<i32>} : memref<16x128xf32, #tpu.memory_space<vmem>>, vector<16x128xf32>,
    } else {
    }
    %c1_i32 = arith.constant 1 : i32
    %3 = arith.cmpi eq, %arg1, %c1_i32 : i32
    %4 = arith.extui %3 : i1 to i32
    %c0_i32_1 = arith.constant 0 : i32
    %5 = arith.cmpi ne, %4, %c0_i32_1 : i32
    scf.if %5 {
      %c0_i32_2 = arith.constant 0 : i32
      %6 = arith.cmpi eq, %arg2, %c0_i32_2 : i32
      %7 = arith.extui %6 : i1 to i32
      %c0_i32_3 = arith.constant 0 : i32
      %8 = arith.cmpi ne, %7, %c0_i32_3 : i32
      scf.if %8 {
        %c0_9 = arith.constant 0 : index
        %c0_10 = arith.constant 0 : index
        %13 = vector.load %arg4[%c0_9, %c0_10] : memref<16x1xi32, #tpu.memory_space<vmem>>, vector<16x1xi32>
        %14 = tpu.iota {dimensions = array<i32: 1>} : vector<16x16xi32>
        %15 = vector.broadcast %13 : vector<16x1xi32> to vector<16x16xi32>
        %16 = arith.cmpi eq, %14, %15 : vector<16x16xi32>
        %cst_11 = arith.constant 1.000000e+00 : f32
        %cst_12 = arith.constant 0.000000e+00 : f32
        %17 = vector.broadcast %cst_11 : f32 to vector<16x16xf32>
        %18 = vector.broadcast %cst_12 : f32 to vector<16x16xf32>
        %19 = arith.select %16, %17, %18 : vector<16x16xi1>, vector<16x16xf32>
        %20 = arith.truncf %19 : vector<16x16xf32> to vector<16x16xbf16>
        %c0_13 = arith.constant 0 : index
        %c0_14 = arith.constant 0 : index
        %21 = vector.load %arg7[%c0_13, %c0_14] : memref<16x128xbf16, #tpu.memory_space<vmem>>, vector<16x128xbf16>
        %cst_15 = arith.constant dense<0.000000e+00> : vector<16x128xf32>
        %22 = tpu.matmul %20, %21, %cst_15 {dimension_numbers = #tpu.dot_dimension_numbers<[1], [0], [0], [1], [0, 0, 1, 1], [], []>} : vector<16x16xbf16>, vector<16x128xbf16>, vector<16x128xf32> -> vector<16x128xf32>
        %c0_16 = arith.constant 0 : index
        %c0_17 = arith.constant 0 : index
        %23 = memref.load %arg3[%c0_16, %c0_17] : memref<1x1xf32, #tpu.memory_space<smem>>
        %cst_18 = arith.constant 1.990000e+01 : f32
        %24 = arith.mulf %23, %cst_18 : f32
        %cst_19 = arith.constant 1.000000e-01 : f32
        %25 = arith.addf %cst_19, %24 : f32
        %cst_20 = arith.constant -5.000000e-01 : f32
        %26 = arith.mulf %cst_20, %25 : f32
        %c0_21 = arith.constant 0 : index
        %c0_22 = arith.constant 0 : index
        %27 = vector.load %arg10[%c0_21, %c0_22] : memref<16x128xf32, #tpu.memory_space<vmem>>, vector<16x128xf32>
        %cst_23 = arith.constant 0.000000e+00 : f32
        %28 = vector.broadcast %cst_23 : f32 to vector<16x128xf32>
        %29 = arith.cmpf ogt, %27, %28 : vector<16x128xf32>
        %30 = vector.broadcast %26 : f32 to vector<16x128xf32>
        %31 = arith.mulf %30, %22 : vector<16x128xf32>
        %cst_24 = arith.constant 0.000000e+00 : f32
        %32 = vector.broadcast %cst_24 : f32 to vector<16x128xf32>
        %33 = arith.select %29, %31, %32 : vector<16x128xi1>, vector<16x128xf32>
        %34 = arith.truncf %33 : vector<16x128xf32> to vector<16x128xbf16>
        %c0_25 = arith.constant 0 : index
        %c0_26 = arith.constant 0 : index
        %35 = vector.load %arg11[%c0_25, %c0_26] : memref<16x128xbf16, #tpu.memory_space<vmem>>, vector<16x128xbf16>
        tpu.vector_store %arg11[%c0_25, %c0_26], %34 {strides = array<i32>} : memref<16x128xbf16, #tpu.memory_space<vmem>>, vector<16x128xbf16>,
      } else {
      }
      %c0 = arith.constant 0 : index
      %c0_4 = arith.constant 0 : index
      %9 = vector.load %arg11[%c0, %c0_4] : memref<16x128xbf16, #tpu.memory_space<vmem>>, vector<16x128xbf16>
      %c0_5 = arith.constant 0 : index
      %c0_6 = arith.constant 0 : index
      %10 = vector.load %arg6[%c0_5, %c0_6] : memref<128x1024xbf16, #tpu.memory_space<vmem>>, vector<128x1024xbf16>
      %cst = arith.constant dense<0.000000e+00> : vector<16x1024xf32>
      %11 = tpu.matmul %9, %10, %cst {dimension_numbers = #tpu.dot_dimension_numbers<[1], [0], [0], [1], [0, 0, 1, 1], [], []>} : vector<16x128xbf16>, vector<128x1024xbf16>, vector<16x1024xf32> -> vector<16x1024xf32>
      %c0_7 = arith.constant 0 : index
      %c0_8 = arith.constant 0 : index
      %12 = vector.load %arg9[%c0_7, %c0_8] : memref<16x1024xf32, #tpu.memory_space<vmem>>, vector<16x1024xf32>
      tpu.vector_store %arg9[%c0_7, %c0_8], %11 {strides = array<i32>} : memref<16x1024xf32, #tpu.memory_space<vmem>>, vector<16x1024xf32>,
    } else {
    }
    return
  }
  func.func @transform_0(%arg0: i32, %arg1: i32, %arg2: i32) -> (i32, i32) {
    %c0_i32 = arith.constant 0 : i32
    %c0_i32_0 = arith.constant 0 : i32
    %c0_i32_1 = arith.constant 0 : i32
    return %c0_i32, %c0_i32_0 : i32, i32
  }
  func.func @transform_1(%arg0: i32, %arg1: i32, %arg2: i32) -> (i32, i32) {
    %c0_i32 = arith.constant 0 : i32
    %c0_i32_0 = arith.constant 0 : i32
    return %arg0, %c0_i32 : i32, i32
  }
  func.func @transform_2(%arg0: i32, %arg1: i32, %arg2: i32) -> (i32, i32) {
    %c1_i32 = arith.constant 1 : i32
    %0 = arith.subi %c1_i32, %arg1 : i32
    %1 = arith.muli %arg2, %0 : i32
    %c0_i32 = arith.constant 0 : i32
    return %arg0, %1 : i32, i32
  }
  func.func @transform_3(%arg0: i32, %arg1: i32, %arg2: i32) -> (i32, i32) {
    %c0_i32 = arith.constant 0 : i32
    %c0_i32_0 = arith.constant 0 : i32
    return %c0_i32, %arg2 : i32, i32
  }
  func.func @transform_4(%arg0: i32, %arg1: i32, %arg2: i32) -> (i32, i32) {
    %c0_i32 = arith.constant 0 : i32
    %c0_i32_0 = arith.constant 0 : i32
    %c0_i32_1 = arith.constant 0 : i32
    return %c0_i32, %c0_i32_0 : i32, i32
  }
  func.func @transform_5(%arg0: i32, %arg1: i32, %arg2: i32) -> (i32, i32) {
    %c0_i32 = arith.constant 0 : i32
    %c0_i32_0 = arith.constant 0 : i32
    %c0_i32_1 = arith.constant 0 : i32
    return %c0_i32, %c0_i32_0 : i32, i32
  }
  func.func @transform_6(%arg0: i32, %arg1: i32, %arg2: i32) -> (i32, i32) {
    %0 = arith.muli %arg2, %arg1 : i32
    %c0_i32 = arith.constant 0 : i32
    return %arg0, %0 : i32, i32
  }
}

</mosaic_0001>

<llo_original>
// kernel: tpu_custom_call.1
$region0: #{tpu_custom_call.1}
  #allocation0 [shape = 'u32[]', space=smem, size = 0x4, offset = 0x4, fixed_abs, tag = 'smem constant byte address 0x4 - core index']
  #allocation1 [shape = 'u32[144,128]{1,0:T(1,128)}', space=vmem, size = 0x12000, scoped, tag = 'internal scratch']
  #allocation2 [shape = 'f32[16,128]{1,0:T(8,128)}', space=vmem, size = 0x2000, scoped, tag = 'scratch operand']
  #allocation3 [shape = 'bf16[16,128]{1,0:T(16,128)(2,1)}', space=vmem, size = 0x1000, scoped, tag = 'scratch operand']
  #allocation4 [shape = 'f32[1,1]{1,0:T(1,128)S(6)}', space=smem, size = 0x200, scoped, tag = 'scoped memory for tpu_custom_call.1']
  %s0 = inlined_call_operand.<no memory space> [shape: f32[1,1], index: 0, kind: input, shape index: {}]
  %s1 = inlined_call_operand.vmem [shape: s32[16,1], index: 1, kind: input, shape index: {}]
  %s2 = inlined_call_operand.hbm [shape: bf16[16,1024], index: 2, kind: input, shape index: {}]
  %s3 = inlined_call_operand.hbm [shape: bf16[128,1024], index: 3, kind: input, shape index: {}]
  %s4 = inlined_call_operand.vmem [shape: bf16[16,128], index: 4, kind: input, shape index: {}]
  %s5 = inlined_call_operand.vmem [shape: f32[1,128], index: 5, kind: input, shape index: {}]
  %s6 = inlined_call_operand.hbm [shape: f32[16,1024], index: 6, kind: output, shape index: {}]
  %s7 = sld [smem:[#allocation0]]
  $region81: #{tpu_custom_call.1} parent=0
    _
  %s9 = ssub.s32 1, %s7
  %s10 = scalar_select 0, %s9, %s7
  %11 = sst [smem:[#allocation4]] %s0
  $region1: #{tpu_custom_call.1} parent=0
    #allocation5 [shape = 'u8[65536]{0}', space=vmem, size = 0x10000, scoped, tag = 'input window, operand 2']
    #allocation6 [shape = 's32[2]{0}', space=sflag, size = 0x8, scoped, tag = 'scoped memory for tpu_custom_call.1']
    #allocation7 [shape = 's32[2]{0}', space=sflag, size = 0x8, scoped, tag = 'scoped memory for tpu_custom_call.1']
    #allocation8 [shape = 'u8[262144]{0}', space=vmem, size = 0x40000, scoped, tag = 'input window, operand 3, single buffered']
    #allocation9 [shape = 's32[1]{0}', space=sflag, size = 0x4, scoped, tag = 'scoped memory for tpu_custom_call.1']
    #allocation10 [shape = 'u8[131072]{0}', space=vmem, size = 0x20000, scoped, tag = 'output window, operand 0']
    %12 = vsyncpa [#allocation6], 0
    %s13 = scalar_lea.sflag [#allocation6], 1
    %14 = vsyncpa %s13, 0
    %15 = vsyncpa [#allocation9], 0
    %16 = vsyncpa [#allocation7], 0
    %s17 = scalar_lea.sflag [#allocation7], 1
    %18 = vsyncpa %s17, 0
    loop: start=0, step=1, limit=4
    $region2: #{tpu_custom_call.1} parent=1 // loop_pre_header
      _
    $region3: #{tpu_custom_call.1} parent=1 // loop_header
      %s20 = sphi 0, %s24
      %p21 = scmp.ge.s32.totalorder %s20, 4
      %s27 = sphi 0, %s46
      %s28 = sphi 0, %s42
      %s29 = sphi 0, %s38
      %s30 = sphi 0, %s27
      %s31 = sphi 0, %s28
      %s32 = sphi 0, %s29
      %s33 = sphi 0, %s30
      %s34 = sphi 0, %s31
      %s35 = sphi 0, %s32
      %s47 = sphi 0, %s47
      %s49 = sphi 0, %s47
      %s50 = sphi 0, %s49
      %s64 = sphi 0, %s50
      %s70 = sphi 0, %s72
      %s73 = sphi 0, %s70
      %s74 = sphi 0, %s73
      %s90 = sphi 0, %s74
      %s102 = sphi 0, %s104
      %s105 = sphi 0, %s102
      %s106 = sphi 0, %s105
      %s122 = sphi 0, %s106
      %s128 = sphi 0, %s130
      %s131 = sphi 0, %s128
      %s132 = sphi 0, %s131
      %s148 = sphi 0, %s132
      %s152 = sphi 0, %s152
      %s154 = sphi 0, %s152
      %s155 = sphi 0, %s154
      %s169 = sphi 0, %s155
      %s173 = sphi 0, %s173
      %s175 = sphi 0, %s173
      %s176 = sphi 0, %s175
      %s190 = sphi 0, %s176
      %s200 = sphi 0, %s202
      %s203 = sphi 0, %s200
      %s204 = sphi 0, %s203
      %s220 = sphi 0, %s204
    $region4: #{tpu_custom_call.1} parent=1 // loop_header_branch
      %23 = sbr.rel (%p21) target = $region8
    $region5: #{tpu_custom_call.1} parent=1 // loop_body
      %s25 = ssub.s32 %s20, 1
      %s26 = ssub.s32 %s20, 2
      %s36 = sadd.s32 1, %s29
      %p37 = scmp.ge.s32.totalorder %s36, 1
      %s38 = scalar_select %p37, 0, %s36
      %s39 = sadd.s32 1, %s28
      %s40 = scalar_select %p37, %s39, %s28
      %p41 = scmp.ge.s32.totalorder %s40, 2
      %s42 = scalar_select %p41, 0, %s40
      %s43 = sadd.s32 1, %s27
      %s44 = scalar_select %p41, %s43, %s27
      %p45 = scmp.ge.s32.totalorder %s44, 1
      %s46 = scalar_select %p45, 0, %s44
      %s48 = sadd.s32 %s47, 1
      %p51 = scmp.eq.s32.totalorder %s20, 1
      %p52 = scmp.ne.s32.totalorder %s47, %s49
      %p53 = scmp.eq.s32.totalorder %s20, 0
      %p54 = por %p52, %p53
      %p55 = scmp.ne.s32.totalorder %s47, %s49
      %p56 = scmp.eq.s32.totalorder %s25, 1
      %p57 = por %p55, %p56
      %p58 = scmp.ne.s32.totalorder %s49, %s50
      %p59 = scmp.eq.s32.totalorder %s25, 0
      %p60 = por %p58, %p59
      %p61 = scmp.ne.s32.totalorder %s49, %s50
      %p62 = scmp.eq.s32.totalorder %s26, 1
      %p63 = por %p61, %p62
      %p65 = scmp.ne.s32.totalorder %s50, %s64
      %p66 = scmp.eq.s32.totalorder %s26, 0
      %p67 = por %p65, %p66
      %s68 = ssub.s32 %s27, %s46
      %p69 = scmp.eq.s32.totalorder %s68, 0
      %s71 = sadd.s32 %s70, 1
      %s72 = scalar_select %p69, %s70, %s71
      %p75 = pneg %p69
      %p76 = scmp.eq.s32.totalorder %s20, 1
      %p77 = por %p75, %p76
      %p78 = scmp.ne.s32.totalorder %s70, %s73
      %p79 = scmp.eq.s32.totalorder %s20, 0
      %p80 = por %p78, %p79
      %p81 = scmp.ne.s32.totalorder %s70, %s73
      %p82 = scmp.eq.s32.totalorder %s25, 1
      %p83 = por %p81, %p82
      %p84 = scmp.ne.s32.totalorder %s73, %s74
      %p85 = scmp.eq.s32.totalorder %s25, 0
      %p86 = por %p84, %p85
      %p87 = scmp.ne.s32.totalorder %s73, %s74
      %p88 = scmp.eq.s32.totalorder %s26, 1
      %p89 = por %p87, %p88
      %p91 = scmp.ne.s32.totalorder %s74, %s90
      %p92 = scmp.eq.s32.totalorder %s26, 0
      %p93 = por %p91, %p92
      %s94 = ssub.s32 1, %s28
      %s95 = smul.u32 %s29, %s94
      %s96 = ssub.s32 1, %s42
      %s97 = smul.u32 %s38, %s96
      %s98 = ssub.s32 %s27, %s46
      %s99 = ssub.s32 %s95, %s97
      %s100 = sor.u32 %s98, %s99
      %p101 = scmp.eq.s32.totalorder %s100, 0
      %s103 = sadd.s32 %s102, 1
      %s104 = scalar_select %p101, %s102, %s103
      %p107 = pneg %p101
      %p108 = scmp.eq.s32.totalorder %s20, 1
      %p109 = por %p107, %p108
      %p110 = scmp.ne.s32.totalorder %s102, %s105
      %p111 = scmp.eq.s32.totalorder %s20, 0
      %p112 = por %p110, %p111
      %p113 = scmp.ne.s32.totalorder %s102, %s105
      %p114 = scmp.eq.s32.totalorder %s25, 1
      %p115 = por %p113, %p114
      %p116 = scmp.ne.s32.totalorder %s105, %s106
      %p117 = scmp.eq.s32.totalorder %s25, 0
      %p118 = por %p116, %p117
      %p119 = scmp.ne.s32.totalorder %s105, %s106
      %p120 = scmp.eq.s32.totalorder %s26, 1
      %p121 = por %p119, %p120
      %p123 = scmp.ne.s32.totalorder %s106, %s122
      %p124 = scmp.eq.s32.totalorder %s26, 0
      %p125 = por %p123, %p124
      %s126 = ssub.s32 %s29, %s38
      %p127 = scmp.eq.s32.totalorder %s126, 0
      %s129 = sadd.s32 %s128, 1
      %s130 = scalar_select %p127, %s128, %s129
      %p133 = pneg %p127
      %p134 = scmp.eq.s32.totalorder %s20, 1
      %p135 = por %p133, %p134
      %p136 = scmp.ne.s32.totalorder %s128, %s131
      %p137 = scmp.eq.s32.totalorder %s20, 0
      %p138 = por %p136, %p137
      %p139 = scmp.ne.s32.totalorder %s128, %s131
      %p140 = scmp.eq.s32.totalorder %s25, 1
      %p141 = por %p139, %p140
      %p142 = scmp.ne.s32.totalorder %s131, %s132
      %p143 = scmp.eq.s32.totalorder %s25, 0
      %p144 = por %p142, %p143
      %p145 = scmp.ne.s32.totalorder %s131, %s132
      %p146 = scmp.eq.s32.totalorder %s26, 1
      %p147 = por %p145, %p146
      %p149 = scmp.ne.s32.totalorder %s132, %s148
      %p150 = scmp.eq.s32.totalorder %s26, 0
      %p151 = por %p149, %p150
      %s153 = sadd.s32 %s152, 1
      %p156 = scmp.eq.s32.totalorder %s20, 1
      %p157 = scmp.ne.s32.totalorder %s152, %s154
      %p158 = scmp.eq.s32.totalorder %s20, 0
      %p159 = por %p157, %p158
      %p160 = scmp.ne.s32.totalorder %s152, %s154
      %p161 = scmp.eq.s32.totalorder %s25, 1
      %p162 = por %p160, %p161
      %p163 = scmp.ne.s32.totalorder %s154, %s155
      %p164 = scmp.eq.s32.totalorder %s25, 0
      %p165 = por %p163, %p164
      %p166 = scmp.ne.s32.totalorder %s154, %s155
      %p167 = scmp.eq.s32.totalorder %s26, 1
      %p168 = por %p166, %p167
      %p170 = scmp.ne.s32.totalorder %s155, %s169
      %p171 = scmp.eq.s32.totalorder %s26, 0
      %p172 = por %p170, %p171
      %s174 = sadd.s32 %s173, 1
      %p177 = scmp.eq.s32.totalorder %s20, 1
      %p178 = scmp.ne.s32.totalorder %s173, %s175
      %p179 = scmp.eq.s32.totalorder %s20, 0
      %p180 = por %p178, %p179
      %p181 = scmp.ne.s32.totalorder %s173, %s175
      %p182 = scmp.eq.s32.totalorder %s25, 1
      %p183 = por %p181, %p182
      %p184 = scmp.ne.s32.totalorder %s175, %s176
      %p185 = scmp.eq.s32.totalorder %s25, 0
      %p186 = por %p184, %p185
      %p187 = scmp.ne.s32.totalorder %s175, %s176
      %p188 = scmp.eq.s32.totalorder %s26, 1
      %p189 = por %p187, %p188
      %p191 = scmp.ne.s32.totalorder %s176, %s190
      %p192 = scmp.eq.s32.totalorder %s26, 0
      %p193 = por %p191, %p192
      %s194 = smul.u32 %s29, %s28
      %s195 = smul.u32 %s38, %s42
      %s196 = ssub.s32 %s27, %s46
      %s197 = ssub.s32 %s194, %s195
      %s198 = sor.u32 %s196, %s197
      %p199 = scmp.eq.s32.totalorder %s198, 0
      %s201 = sadd.s32 %s200, 1
      %s202 = scalar_select %p199, %s200, %s201
      %p205 = pneg %p199
      %p206 = scmp.eq.s32.totalorder %s20, 1
      %p207 = por %p205, %p206
      %p208 = scmp.ne.s32.totalorder %s200, %s203
      %p209 = scmp.eq.s32.totalorder %s20, 0
      %p210 = por %p208, %p209
      %p211 = scmp.ne.s32.totalorder %s200, %s203
      %p212 = scmp.eq.s32.totalorder %s25, 1
      %p213 = por %p211, %p212
      %p214 = scmp.ne.s32.totalorder %s203, %s204
      %p215 = scmp.eq.s32.totalorder %s25, 0
      %p216 = por %p214, %p215
      %p217 = scmp.ne.s32.totalorder %s203, %s204
      %p218 = scmp.eq.s32.totalorder %s26, 1
      %p219 = por %p217, %p218
      %p221 = scmp.ne.s32.totalorder %s204, %s220
      %p222 = scmp.eq.s32.totalorder %s26, 0
      %p223 = por %p221, %p222
      %p224 = scmp.le.s32.totalorder 1, %s20
      %p225 = scmp.lt.s32.totalorder %s20, 3
      %p226 = pnand %p224, %p225
      %p227 = pneg %p226
      // Predicated region
      $region9: #{tpu_custom_call.1} parent=5 // pred_check
        _
      $region10: #{tpu_custom_call.1} parent=5 // pred_check_branch
        %229 = sbr.rel (%p226) target = $region12
      $region11: #{tpu_custom_call.1} parent=5 // pred_region
        %s230 = ssub.s32 %s20, 1
        // Predicated region
        $region13: #{tpu_custom_call.1} parent=11 // pred_check
          %p231 = pneg %p60
        $region14: #{tpu_custom_call.1} parent=11 // pred_check_branch
          %233 = sbr.rel (%p231) target = $region16
        $region15: #{tpu_custom_call.1} parent=11 // pred_region
          _
        $region16: #{tpu_custom_call.1} parent=11 // pred_fallthru
          _
        // Predicated region
        $region17: #{tpu_custom_call.1} parent=11 // pred_check
          %p234 = pneg %p86
        $region18: #{tpu_custom_call.1} parent=11 // pred_check_branch
          %236 = sbr.rel (%p234) target = $region20
        $region19: #{tpu_custom_call.1} parent=11 // pred_region
          %s237 = smul.u32 2, %s30
          %p238 = scmp.lt.s32.totalorder %s237, 1
          %s239 = scalar_select %p238, %s237, 1
          %s240 = smul.addr %s239, 8
          %s241 = scalar_lea.vmem %s1, %s240
          %s242 = smul.u32 2, %s30
        $region20: #{tpu_custom_call.1} parent=11 // pred_fallthru
          _
        // Predicated region
        $region21: #{tpu_custom_call.1} parent=11 // pred_check
          %p243 = pneg %p144
        $region22: #{tpu_custom_call.1} parent=11 // pred_check_branch
          %245 = sbr.rel (%p243) target = $region24
        $region23: #{tpu_custom_call.1} parent=11 // pred_region
          %s246 = smul.u32 8, %s32
          %s248 = ssub.s32 8192, 8192
          %249 = vsyncadd [#allocation9], %s248
          %s250 = smul.addr %s246, 64
          %s251 = scalar_lea.hbm %s3, %s250
          %s252 = sshll.u32 [#allocation8], 4
          %s253 = int_to_ptr.vmem [resolvable:$true] %s252
          %258 = dma.hbm_to_vmem [thread:$0]  %s251, 8192, %s253, [#allocation9], 512, 512, 32
        $region24: #{tpu_custom_call.1} parent=11 // pred_fallthru
          _
        // Predicated region
        $region25: #{tpu_custom_call.1} parent=11 // pred_check
          %p259 = pneg %p165
        $region26: #{tpu_custom_call.1} parent=11 // pred_check_branch
          %261 = sbr.rel (%p259) target = $region28
        $region27: #{tpu_custom_call.1} parent=11 // pred_region
          _
        $region28: #{tpu_custom_call.1} parent=11 // pred_fallthru
          _
        // Predicated region
        $region29: #{tpu_custom_call.1} parent=11 // pred_check
          %p262 = pneg %p186
        $region30: #{tpu_custom_call.1} parent=11 // pred_check_branch
          %264 = sbr.rel (%p262) target = $region32
        $region31: #{tpu_custom_call.1} parent=11 // pred_region
          _
        $region32: #{tpu_custom_call.1} parent=11 // pred_fallthru
          _
      $region12: #{tpu_custom_call.1} parent=5 // pred_fallthru
        _
      %p265 = scmp.lt.s32.totalorder %s20, 2
      // Predicated region
      $region33: #{tpu_custom_call.1} parent=5 // pred_check
        %p266 = pneg %p265
      $region34: #{tpu_custom_call.1} parent=5 // pred_check_branch
        %268 = sbr.rel (%p266) target = $region36
      $region35: #{tpu_custom_call.1} parent=5 // pred_region
        // Predicated region
        $region37: #{tpu_custom_call.1} parent=35 // pred_check
          %p269 = pneg %p112
        $region38: #{tpu_custom_call.1} parent=35 // pred_check_branch
          %271 = sbr.rel (%p269) target = $region40
        $region39: #{tpu_custom_call.1} parent=35 // pred_region
          %s272 = sand.u32 %s102, 1
          %s273 = scalar_lea.sflag [#allocation6], %s272
          %s274 = sand.u32 %s102, 1
          %s275 = smul.addr %s274, 64
          %s276 = scalar_lea.vmem [#allocation5], %s275
          %s277 = ssub.s32 1, %s28
          %s278 = smul.u32 %s29, %s277
          %s279 = smul.u32 2, %s27
          %s280 = smul.u32 8, %s278
          %s282 = ssub.s32 1024, 1024
          %283 = vsyncadd %s273, %s282
          %s284 = smul.addr %s279, 8
          %s285 = sadd.s32 %s280, %s284
          %s286 = smul.addr %s285, 64
          %s287 = scalar_lea.hbm %s2, %s286
          %s288 = sshll.u32 %s276, 4
          %s289 = int_to_ptr.vmem [resolvable:$true] %s288
          %294 = dma.hbm_to_vmem [thread:$0]  %s287, 1024, %s289, %s273, 512, 512, 32
        $region40: #{tpu_custom_call.1} parent=35 // pred_fallthru
          _
      $region36: #{tpu_custom_call.1} parent=5 // pred_fallthru
        _
      %p295 = scmp.le.s32.totalorder 1, %s20
      %p296 = scmp.lt.s32.totalorder %s20, 3
      %p297 = pnand %p295, %p296
      %p298 = pneg %p297
      // Predicated region
      $region41: #{tpu_custom_call.1} parent=5 // pred_check
        _
      $region42: #{tpu_custom_call.1} parent=5 // pred_check_branch
        %300 = sbr.rel (%p297) target = $region44
      $region43: #{tpu_custom_call.1} parent=5 // pred_region
        %s301 = ssub.s32 %s20, 1
        %s302 = sand.u32 %s105, 1
        %s303 = scalar_lea.sflag [#allocation6], %s302
        %s304 = sand.u32 %s105, 1
        %s305 = smul.addr %s304, 64
        %s306 = scalar_lea.vmem [#allocation5], %s305
        // Predicated region
        $region45: #{tpu_custom_call.1} parent=43 // pred_check
          %p307 = pneg %p118
        $region46: #{tpu_custom_call.1} parent=43 // pred_check_branch
          %309 = sbr.rel (%p307) target = $region48
        $region47: #{tpu_custom_call.1} parent=43 // pred_region
          %310 = dma.done %s303, 1024
        $region48: #{tpu_custom_call.1} parent=43 // pred_fallthru
          _
        // Predicated region
        $region49: #{tpu_custom_call.1} parent=43 // pred_check
          %p311 = pneg %p144
        $region50: #{tpu_custom_call.1} parent=43 // pred_check_branch
          %313 = sbr.rel (%p311) target = $region52
        $region51: #{tpu_custom_call.1} parent=43 // pred_region
          %314 = dma.done [#allocation9], 8192
        $region52: #{tpu_custom_call.1} parent=43 // pred_fallthru
          _
        %p315 = pneg %p60
        %p316 = pneg %p57
        %s317 = smul.u32 2, %s30
        %p318 = scmp.lt.s32.totalorder %s317, 1
        %s319 = scalar_select %p318, %s317, 1
        %s320 = smul.addr %s319, 8
        %s321 = scalar_lea.vmem %s1, %s320
        %p322 = pneg %p86
        %p323 = pneg %p83
        %s324 = sand.u32 %s105, 1
        %s325 = scalar_lea.sflag [#allocation6], %s324
        %s326 = sand.u32 %s105, 1
        %s327 = smul.addr %s326, 64
        %s328 = scalar_lea.vmem [#allocation5], %s327
        %p329 = pneg %p118
        %p330 = pneg %p115
        %p331 = pneg %p144
        %p332 = pneg %p141
        %p333 = pneg %p165
        %p334 = pneg %p162
        %p335 = pneg %p186
        %p336 = pneg %p183
        %p337 = pneg %p216
        %p338 = pneg %p213
        %s339 = sand.u32 %s203, 1
        %s340 = scalar_lea.sflag [#allocation7], %s339
        %s341 = sand.u32 %s203, 1
        %s342 = smul.addr %s341, 128
        %s343 = scalar_lea.vmem [#allocation10], %s342
        %s344 = smul.u32 2, %s30
        %p345 = scmp.lt.s32.totalorder %s344, 1
        %s346 = scalar_select %p345, %s344, 1
        %s347 = smul.addr %s346, 8
        %s348 = scalar_lea.vmem %s1, %s347
        %s349 = smul.u32 2, %s30
        %s350 = ssub.s32 1, %s31
        %s351 = smul.u32 %s32, %s350
        %s352 = smul.u32 2, %s30
        %s353 = smul.u32 8, %s351
        %s354 = smul.u32 8, %s32
        %s355 = smul.u32 %s32, %s31
        %s356 = smul.u32 2, %s30
        %s357 = smul.u32 8, %s355
        %p359 = scmp.eq.s32.totalorder %s31, 0
        // Predicated region
        $region53: #{tpu_custom_call.1} parent=43 // pred_check
          %p360 = pneg %p359
        $region54: #{tpu_custom_call.1} parent=43 // pred_check_branch
          %362 = sbr.rel (%p360) target = $region56
        $region55: #{tpu_custom_call.1} parent=43 // pred_region
          %p363 = scmp.eq.s32.totalorder %s32, 0
          // Predicated region
          $region57: #{tpu_custom_call.1} parent=55 // pred_check
            %p364 = pneg %p363
          $region58: #{tpu_custom_call.1} parent=55 // pred_check_branch
            %366 = sbr.rel (%p364) target = $region60
          $region59: #{tpu_custom_call.1} parent=55 // pred_region
            %v367 = vld [vmem:[%s5] sm:$0x1]
            %v369 = vlaneseq
            %v370 = vshrl.u32 %v369, 7
            %v371 = vsub.s32 0, %v370
            %v372 = vrot.slane %v367, %v371
            %374 = vst [vmem:[#allocation2] sm:$0xff] %v372
            %375 = vst [vmem:[#allocation2 + $0x8] sm:$0xff] %v372
          $region60: #{tpu_custom_call.1} parent=55 // pred_fallthru
            _
          %v376 = vld [vmem:[#allocation2] sm:$0xff]
          %v377 = vld [vmem:[#allocation2 + $0x8] sm:$0xff]
          %v378 = vld [vmem:[%s306] sm:$0xff]
          %v379 = vld [vmem:[%s306 + $0x8] sm:$0xff]
          %v380 = vld [vmem:[%s306 + $0x10] sm:$0xff]
          %v381 = vld [vmem:[%s306 + $0x18] sm:$0xff]
          %v382 = vld [vmem:[%s306 + $0x20] sm:$0xff]
          %v383 = vld [vmem:[%s306 + $0x28] sm:$0xff]
          %v384 = vld [vmem:[%s306 + $0x30] sm:$0xff]
          %v385 = vld [vmem:[%s306 + $0x38] sm:$0xff]
          %v386 = vld [vmem:[#allocation8] sm:$0xff]
          %v387 = vld [vmem:[#allocation8 + $0x8] sm:$0xff]
          %v388 = vld [vmem:[#allocation8 + $0x10] sm:$0xff]
          %v389 = vld [vmem:[#allocation8 + $0x18] sm:$0xff]
          %v390 = vld [vmem:[#allocation8 + $0x20] sm:$0xff]
          %v391 = vld [vmem:[#allocation8 + $0x28] sm:$0xff]
          %v392 = vld [vmem:[#allocation8 + $0x30] sm:$0xff]
          %v393 = vld [vmem:[#allocation8 + $0x38] sm:$0xff]
          %v394 = vld [vmem:[#allocation8 + $0x40] sm:$0xff]
          %v395 = vld [vmem:[#allocation8 + $0x48] sm:$0xff]
          %v396 = vld [vmem:[#allocation8 + $0x50] sm:$0xff]
          %v397 = vld [vmem:[#allocation8 + $0x58] sm:$0xff]
          %v398 = vld [vmem:[#allocation8 + $0x60] sm:$0xff]
          %v399 = vld [vmem:[#allocation8 + $0x68] sm:$0xff]
          %v400 = vld [vmem:[#allocation8 + $0x70] sm:$0xff]
          %v401 = vld [vmem:[#allocation8 + $0x78] sm:$0xff]
          %v402 = vld [vmem:[#allocation8 + $0x80] sm:$0xff]
          %v403 = vld [vmem:[#allocation8 + $0x88] sm:$0xff]
          %v404 = vld [vmem:[#allocation8 + $0x90] sm:$0xff]
          %v405 = vld [vmem:[#allocation8 + $0x98] sm:$0xff]
          %v406 = vld [vmem:[#allocation8 + $0xa0] sm:$0xff]
          %v407 = vld [vmem:[#allocation8 + $0xa8] sm:$0xff]
          %v408 = vld [vmem:[#allocation8 + $0xb0] sm:$0xff]
          %v409 = vld [vmem:[#allocation8 + $0xb8] sm:$0xff]
          %v410 = vld [vmem:[#allocation8 + $0xc0] sm:$0xff]
          %v411 = vld [vmem:[#allocation8 + $0xc8] sm:$0xff]
          %v412 = vld [vmem:[#allocation8 + $0xd0] sm:$0xff]
          %v413 = vld [vmem:[#allocation8 + $0xd8] sm:$0xff]
          %v414 = vld [vmem:[#allocation8 + $0xe0] sm:$0xff]
          %v415 = vld [vmem:[#allocation8 + $0xe8] sm:$0xff]
          %v416 = vld [vmem:[#allocation8 + $0xf0] sm:$0xff]
          %v417 = vld [vmem:[#allocation8 + $0xf8] sm:$0xff]
          %v418 = vld [vmem:[#allocation8 + $0x100] sm:$0xff]
          %v419 = vld [vmem:[#allocation8 + $0x108] sm:$0xff]
          %v420 = vld [vmem:[#allocation8 + $0x110] sm:$0xff]
          %v421 = vld [vmem:[#allocation8 + $0x118] sm:$0xff]
          %v422 = vld [vmem:[#allocation8 + $0x120] sm:$0xff]
          %v423 = vld [vmem:[#allocation8 + $0x128] sm:$0xff]
          %v424 = vld [vmem:[#allocation8 + $0x130] sm:$0xff]
          %v425 = vld [vmem:[#allocation8 + $0x138] sm:$0xff]
          %v426 = vld [vmem:[#allocation8 + $0x140] sm:$0xff]
          %v427 = vld [vmem:[#allocation8 + $0x148] sm:$0xff]
          %v428 = vld [vmem:[#allocation8 + $0x150] sm:$0xff]
          %v429 = vld [vmem:[#allocation8 + $0x158] sm:$0xff]
          %v430 = vld [vmem:[#allocation8 + $0x160] sm:$0xff]
          %v431 = vld [vmem:[#allocation8 + $0x168] sm:$0xff]
          %v432 = vld [vmem:[#allocation8 + $0x170] sm:$0xff]
          %v433 = vld [vmem:[#allocation8 + $0x178] sm:$0xff]
          %v434 = vld [vmem:[#allocation8 + $0x180] sm:$0xff]
          %v435 = vld [vmem:[#allocation8 + $0x188] sm:$0xff]
          %v436 = vld [vmem:[#allocation8 + $0x190] sm:$0xff]
          %v437 = vld [vmem:[#allocation8 + $0x198] sm:$0xff]
          %v438 = vld [vmem:[#allocation8 + $0x1a0] sm:$0xff]
          %v439 = vld [vmem:[#allocation8 + $0x1a8] sm:$0xff]
          %v440 = vld [vmem:[#allocation8 + $0x1b0] sm:$0xff]
          %v441 = vld [vmem:[#allocation8 + $0x1b8] sm:$0xff]
          %v442 = vld [vmem:[#allocation8 + $0x1c0] sm:$0xff]
          %v443 = vld [vmem:[#allocation8 + $0x1c8] sm:$0xff]
          %v444 = vld [vmem:[#allocation8 + $0x1d0] sm:$0xff]
          %v445 = vld [vmem:[#allocation8 + $0x1d8] sm:$0xff]
          %v446 = vld [vmem:[#allocation8 + $0x1e0] sm:$0xff]
          %v447 = vld [vmem:[#allocation8 + $0x1e8] sm:$0xff]
          %v448 = vld [vmem:[#allocation8 + $0x1f0] sm:$0xff]
          %v449 = vld [vmem:[#allocation8 + $0x1f8] sm:$0xff]
          %v458 = vunpack.c.l.b16 %v378
          %v459 = vunpack.c.h.b16 %v378
          %v460 = vunpack.c.l.b16 %v379
          %v461 = vunpack.c.h.b16 %v379
          %v462 = vunpack.c.l.b16 %v380
          %v463 = vunpack.c.h.b16 %v380
          %v464 = vunpack.c.l.b16 %v381
          %v465 = vunpack.c.h.b16 %v381
          %v466 = vunpack.c.l.b16 %v382
          %v467 = vunpack.c.h.b16 %v382
          %v468 = vunpack.c.l.b16 %v383
          %v469 = vunpack.c.h.b16 %v383
          %v470 = vunpack.c.l.b16 %v384
          %v471 = vunpack.c.h.b16 %v384
          %v472 = vunpack.c.l.b16 %v385
          %v473 = vunpack.c.h.b16 %v385
          %v474 = vpack.c.b16 %v466, %v458
          %v475 = vpack.c.b16 %v467, %v459
          %v476 = vpack.c.b16 %v468, %v460
          %v477 = vpack.c.b16 %v469, %v461
          %v478 = vpack.c.b16 %v470, %v462
          %v479 = vpack.c.b16 %v471, %v463
          %v480 = vpack.c.b16 %v472, %v464
          %v481 = vpack.c.b16 %v473, %v465
          %v554 = vunpack.c.l.b16 %v386
          %v555 = vunpack.c.h.b16 %v386
          %v556 = vunpack.c.l.b16 %v387
          %v557 = vunpack.c.h.b16 %v387
          %v558 = vunpack.c.l.b16 %v388
          %v559 = vunpack.c.h.b16 %v388
          %v560 = vunpack.c.l.b16 %v389
          %v561 = vunpack.c.h.b16 %v389
          %v562 = vunpack.c.l.b16 %v390
          %v563 = vunpack.c.h.b16 %v390
          %v564 = vunpack.c.l.b16 %v391
          %v565 = vunpack.c.h.b16 %v391
          %v566 = vunpack.c.l.b16 %v392
          %v567 = vunpack.c.h.b16 %v392
          %v568 = vunpack.c.l.b16 %v393
          %v569 = vunpack.c.h.b16 %v393
          %v570 = vunpack.c.l.b16 %v394
          %v571 = vunpack.c.h.b16 %v394
          %v572 = vunpack.c.l.b16 %v395
          %v573 = vunpack.c.h.b16 %v395
          %v574 = vunpack.c.l.b16 %v396
          %v575 = vunpack.c.h.b16 %v396
          %v576 = vunpack.c.l.b16 %v397
          %v577 = vunpack.c.h.b16 %v397
          %v578 = vunpack.c.l.b16 %v398
          %v579 = vunpack.c.h.b16 %v398
          %v580 = vunpack.c.l.b16 %v399
          %v581 = vunpack.c.h.b16 %v399
          %v582 = vunpack.c.l.b16 %v400
          %v583 = vunpack.c.h.b16 %v400
          %v584 = vunpack.c.l.b16 %v401
          %v585 = vunpack.c.h.b16 %v401
          %v586 = vunpack.c.l.b16 %v402
          %v587 = vunpack.c.h.b16 %v402
          %v588 = vunpack.c.l.b16 %v403
          %v589 = vunpack.c.h.b16 %v403
          %v590 = vunpack.c.l.b16 %v404
          %v591 = vunpack.c.h.b16 %v404
          %v592 = vunpack.c.l.b16 %v405
          %v593 = vunpack.c.h.b16 %v405
          %v594 = vunpack.c.l.b16 %v406
          %v595 = vunpack.c.h.b16 %v406
          %v596 = vunpack.c.l.b16 %v407
          %v597 = vunpack.c.h.b16 %v407
          %v598 = vunpack.c.l.b16 %v408
          %v599 = vunpack.c.h.b16 %v408
          %v600 = vunpack.c.l.b16 %v409
          %v601 = vunpack.c.h.b16 %v409
          %v602 = vunpack.c.l.b16 %v410
          %v603 = vunpack.c.h.b16 %v410
          %v604 = vunpack.c.l.b16 %v411
          %v605 = vunpack.c.h.b16 %v411
          %v606 = vunpack.c.l.b16 %v412
          %v607 = vunpack.c.h.b16 %v412
          %v608 = vunpack.c.l.b16 %v413
          %v609 = vunpack.c.h.b16 %v413
          %v610 = vunpack.c.l.b16 %v414
          %v611 = vunpack.c.h.b16 %v414
          %v612 = vunpack.c.l.b16 %v415
          %v613 = vunpack.c.h.b16 %v415
          %v614 = vunpack.c.l.b16 %v416
          %v615 = vunpack.c.h.b16 %v416
          %v616 = vunpack.c.l.b16 %v417
          %v617 = vunpack.c.h.b16 %v417
          %v618 = vunpack.c.l.b16 %v418
          %v619 = vunpack.c.h.b16 %v418
          %v620 = vunpack.c.l.b16 %v419
          %v621 = vunpack.c.h.b16 %v419
          %v622 = vunpack.c.l.b16 %v420
          %v623 = vunpack.c.h.b16 %v420
          %v624 = vunpack.c.l.b16 %v421
          %v625 = vunpack.c.h.b16 %v421
          %v626 = vunpack.c.l.b16 %v422
          %v627 = vunpack.c.h.b16 %v422
          %v628 = vunpack.c.l.b16 %v423
          %v629 = vunpack.c.h.b16 %v423
          %v630 = vunpack.c.l.b16 %v424
          %v631 = vunpack.c.h.b16 %v424
          %v632 = vunpack.c.l.b16 %v425
          %v633 = vunpack.c.h.b16 %v425
          %v634 = vunpack.c.l.b16 %v426
          %v635 = vunpack.c.h.b16 %v426
          %v636 = vunpack.c.l.b16 %v427
          %v637 = vunpack.c.h.b16 %v427
          %v638 = vunpack.c.l.b16 %v428
          %v639 = vunpack.c.h.b16 %v428
          %v640 = vunpack.c.l.b16 %v429
          %v641 = vunpack.c.h.b16 %v429
          %v642 = vunpack.c.l.b16 %v430
          %v643 = vunpack.c.h.b16 %v430
          %v644 = vunpack.c.l.b16 %v431
          %v645 = vunpack.c.h.b16 %v431
          %v646 = vunpack.c.l.b16 %v432
          %v647 = vunpack.c.h.b16 %v432
          %v648 = vunpack.c.l.b16 %v433
          %v649 = vunpack.c.h.b16 %v433
          %v650 = vunpack.c.l.b16 %v434
          %v651 = vunpack.c.h.b16 %v434
          %v652 = vunpack.c.l.b16 %v435
          %v653 = vunpack.c.h.b16 %v435
          %v654 = vunpack.c.l.b16 %v436
          %v655 = vunpack.c.h.b16 %v436
          %v656 = vunpack.c.l.b16 %v437
          %v657 = vunpack.c.h.b16 %v437
          %v658 = vunpack.c.l.b16 %v438
          %v659 = vunpack.c.h.b16 %v438
          %v660 = vunpack.c.l.b16 %v439
          %v661 = vunpack.c.h.b16 %v439
          %v662 = vunpack.c.l.b16 %v440
          %v663 = vunpack.c.h.b16 %v440
          %v664 = vunpack.c.l.b16 %v441
          %v665 = vunpack.c.h.b16 %v441
          %v666 = vunpack.c.l.b16 %v442
          %v667 = vunpack.c.h.b16 %v442
          %v668 = vunpack.c.l.b16 %v443
          %v669 = vunpack.c.h.b16 %v443
          %v670 = vunpack.c.l.b16 %v444
          %v671 = vunpack.c.h.b16 %v444
          %v672 = vunpack.c.l.b16 %v445
          %v673 = vunpack.c.h.b16 %v445
          %v674 = vunpack.c.l.b16 %v446
          %v675 = vunpack.c.h.b16 %v446
          %v676 = vunpack.c.l.b16 %v447
          %v677 = vunpack.c.h.b16 %v447
          %v678 = vunpack.c.l.b16 %v448
          %v679 = vunpack.c.h.b16 %v448
          %v680 = vunpack.c.l.b16 %v449
          %v681 = vunpack.c.h.b16 %v449
          %v682 = vpack.c.b16 %v562, %v554
          %v683 = vpack.c.b16 %v563, %v555
          %v684 = vpack.c.b16 %v564, %v556
          %v685 = vpack.c.b16 %v565, %v557
          %v686 = vpack.c.b16 %v566, %v558
          %v687 = vpack.c.b16 %v567, %v559
          %v688 = vpack.c.b16 %v568, %v560
          %v689 = vpack.c.b16 %v569, %v561
          %v690 = vpack.c.b16 %v578, %v570
          %v691 = vpack.c.b16 %v579, %v571
          %v692 = vpack.c.b16 %v580, %v572
          %v693 = vpack.c.b16 %v581, %v573
          %v694 = vpack.c.b16 %v582, %v574
          %v695 = vpack.c.b16 %v583, %v575
          %v696 = vpack.c.b16 %v584, %v576
          %v697 = vpack.c.b16 %v585, %v577
          %v698 = vpack.c.b16 %v594, %v586
          %v699 = vpack.c.b16 %v595, %v587
          %v700 = vpack.c.b16 %v596, %v588
          %v701 = vpack.c.b16 %v597, %v589
          %v702 = vpack.c.b16 %v598, %v590
          %v703 = vpack.c.b16 %v599, %v591
          %v704 = vpack.c.b16 %v600, %v592
          %v705 = vpack.c.b16 %v601, %v593
          %v706 = vpack.c.b16 %v610, %v602
          %v707 = vpack.c.b16 %v611, %v603
          %v708 = vpack.c.b16 %v612, %v604
          %v709 = vpack.c.b16 %v613, %v605
          %v710 = vpack.c.b16 %v614, %v606
          %v711 = vpack.c.b16 %v615, %v607
          %v712 = vpack.c.b16 %v616, %v608
          %v713 = vpack.c.b16 %v617, %v609
          %v714 = vpack.c.b16 %v626, %v618
          %v715 = vpack.c.b16 %v627, %v619
          %v716 = vpack.c.b16 %v628, %v620
          %v717 = vpack.c.b16 %v629, %v621
          %v718 = vpack.c.b16 %v630, %v622
          %v719 = vpack.c.b16 %v631, %v623
          %v720 = vpack.c.b16 %v632, %v624
          %v721 = vpack.c.b16 %v633, %v625
          %v722 = vpack.c.b16 %v642, %v634
          %v723 = vpack.c.b16 %v643, %v635
          %v724 = vpack.c.b16 %v644, %v636
          %v725 = vpack.c.b16 %v645, %v637
          %v726 = vpack.c.b16 %v646, %v638
          %v727 = vpack.c.b16 %v647, %v639
          %v728 = vpack.c.b16 %v648, %v640
          %v729 = vpack.c.b16 %v649, %v641
          %v730 = vpack.c.b16 %v658, %v650
          %v731 = vpack.c.b16 %v659, %v651
          %v732 = vpack.c.b16 %v660, %v652
          %v733 = vpack.c.b16 %v661, %v653
          %v734 = vpack.c.b16 %v662, %v654
          %v735 = vpack.c.b16 %v663, %v655
          %v736 = vpack.c.b16 %v664, %v656
          %v737 = vpack.c.b16 %v665, %v657
          %v738 = vpack.c.b16 %v674, %v666
          %v739 = vpack.c.b16 %v675, %v667
          %v740 = vpack.c.b16 %v676, %v668
          %v741 = vpack.c.b16 %v677, %v669
          %v742 = vpack.c.b16 %v678, %v670
          %v743 = vpack.c.b16 %v679, %v671
          %v744 = vpack.c.b16 %v680, %v672
          %v745 = vpack.c.b16 %v681, %v673
          %810 = vmatprep.subr.bf16.mxu0 %v683
          %811 = vmatpush1.bf16.xpose.msra.mxu0 %v682
          %812 = vmatprep.subr.bf16.mxu0 %v691
          %813 = vmatpush1.bf16.xpose.msra.mxu0 %v690
          %814 = vmatprep.subr.bf16.mxu0 %v699
          %815 = vmatpush1.bf16.xpose.msra.mxu0 %v698
          %816 = vmatprep.subr.bf16.mxu0 %v707
          %817 = vmatpush1.bf16.xpose.msra.mxu0 %v706
          %818 = vmatprep.subr.bf16.mxu0 %v715
          %819 = vmatpush1.bf16.xpose.msra.mxu0 %v714
          %820 = vmatprep.subr.bf16.mxu0 %v723
          %821 = vmatpush1.bf16.xpose.msra.mxu0 %v722
          %822 = vmatprep.subr.bf16.mxu0 %v731
          %823 = vmatpush1.bf16.xpose.msra.mxu0 %v730
          %824 = vmatprep.subr.bf16.mxu0 %v739
          %825 = vmatpush1.bf16.xpose.msra.mxu0 %v738
          %826 = vmatprep.subr.bf16.mxu0 0
          %827 = vmatpush1.bf16.xpose.msra.mxu0 0
          %828 = vmatprep.subr.bf16.mxu0 0
          %829 = vmatpush1.bf16.xpose.msra.mxu0 0
          %830 = vmatprep.subr.bf16.mxu0 0
          %831 = vmatpush1.bf16.xpose.msra.mxu0 0
          %832 = vmatprep.subr.bf16.mxu0 0
          %833 = vmatpush1.bf16.xpose.msra.mxu0 0
          %834 = vmatprep.subr.bf16.mxu0 0
          %835 = vmatpush1.bf16.xpose.msra.mxu0 0
          %836 = vmatprep.subr.bf16.mxu0 0
          %837 = vmatpush1.bf16.xpose.msra.mxu0 0
          %838 = vmatprep.subr.bf16.mxu0 0
          %839 = vmatpush1.bf16.xpose.msra.mxu0 0
          %840 = vmatprep.subr.bf16.mxu0 0
          %841 = vmatpush1.bf16.xpose.msra.mxu0 0
          %842 = vmatprep.mubr.bf16.mxu0 %v475
          %843 = vmatmul.mubr.bf16.gmra.mrb[0].mxu0 %v474
          %v844 = vpop.f32.mrb[0].mxu0
          %v845 = vadd.f32 0.0, %v844
          %v846 = vpop.f32.mrb[0].mxu0
          %v847 = vpop.f32.mrb[0].mxu0
          %v848 = vadd.f32 0.0, %v847
          %v849 = vpop.f32.mrb[0].mxu0
          %850 = vdwg.mxu0
          %851 = vmatprep.subr.bf16.mxu0 %v685
          %852 = vmatpush1.bf16.xpose.msra.mxu0 %v684
          %853 = vmatprep.subr.bf16.mxu0 %v693
          %854 = vmatpush1.bf16.xpose.msra.mxu0 %v692
          %855 = vmatprep.subr.bf16.mxu0 %v701
          %856 = vmatpush1.bf16.xpose.msra.mxu0 %v700
          %857 = vmatprep.subr.bf16.mxu0 %v709
          %858 = vmatpush1.bf16.xpose.msra.mxu0 %v708
          %859 = vmatprep.subr.bf16.mxu0 %v717
          %860 = vmatpush1.bf16.xpose.msra.mxu0 %v716
          %861 = vmatprep.subr.bf16.mxu0 %v725
          %862 = vmatpush1.bf16.xpose.msra.mxu0 %v724
          %863 = vmatprep.subr.bf16.mxu0 %v733
          %864 = vmatpush1.bf16.xpose.msra.mxu0 %v732
          %865 = vmatprep.subr.bf16.mxu0 %v741
          %866 = vmatpush1.bf16.xpose.msra.mxu0 %v740
          %867 = vmatprep.subr.bf16.mxu0 0
          %868 = vmatpush1.bf16.xpose.msra.mxu0 0
          %869 = vmatprep.subr.bf16.mxu0 0
          %870 = vmatpush1.bf16.xpose.msra.mxu0 0
          %871 = vmatprep.subr.bf16.mxu0 0
          %872 = vmatpush1.bf16.xpose.msra.mxu0 0
          %873 = vmatprep.subr.bf16.mxu0 0
          %874 = vmatpush1.bf16.xpose.msra.mxu0 0
          %875 = vmatprep.subr.bf16.mxu0 0
          %876 = vmatpush1.bf16.xpose.msra.mxu0 0
          %877 = vmatprep.subr.bf16.mxu0 0
          %878 = vmatpush1.bf16.xpose.msra.mxu0 0
          %879 = vmatprep.subr.bf16.mxu0 0
          %880 = vmatpush1.bf16.xpose.msra.mxu0 0
          %881 = vmatprep.subr.bf16.mxu0 0
          %882 = vmatpush1.bf16.xpose.msra.mxu0 0
          %883 = vmatprep.mubr.bf16.mxu0 %v477
          %884 = vmatmul.mubr.bf16.gmra.mrb[0].mxu0 %v476
          %v885 = vpop.f32.mrb[0].mxu0
          %v886 = vadd.f32 %v845, %v885
          %v887 = vpop.f32.mrb[0].mxu0
          %v888 = vpop.f32.mrb[0].mxu0
          %v889 = vadd.f32 %v848, %v888
          %v890 = vpop.f32.mrb[0].mxu0
          %891 = vdwg.mxu0
          %892 = vmatprep.subr.bf16.mxu0 %v687
          %893 = vmatpush1.bf16.xpose.msra.mxu0 %v686
          %894 = vmatprep.subr.bf16.mxu0 %v695
          %895 = vmatpush1.bf16.xpose.msra.mxu0 %v694
          %896 = vmatprep.subr.bf16.mxu0 %v703
          %897 = vmatpush1.bf16.xpose.msra.mxu0 %v702
          %898 = vmatprep.subr.bf16.mxu0 %v711
          %899 = vmatpush1.bf16.xpose.msra.mxu0 %v710
          %900 = vmatprep.subr.bf16.mxu0 %v719
          %901 = vmatpush1.bf16.xpose.msra.mxu0 %v718
          %902 = vmatprep.subr.bf16.mxu0 %v727
          %903 = vmatpush1.bf16.xpose.msra.mxu0 %v726
          %904 = vmatprep.subr.bf16.mxu0 %v735
          %905 = vmatpush1.bf16.xpose.msra.mxu0 %v734
          %906 = vmatprep.subr.bf16.mxu0 %v743
          %907 = vmatpush1.bf16.xpose.msra.mxu0 %v742
          %908 = vmatprep.subr.bf16.mxu0 0
          %909 = vmatpush1.bf16.xpose.msra.mxu0 0
          %910 = vmatprep.subr.bf16.mxu0 0
          %911 = vmatpush1.bf16.xpose.msra.mxu0 0
          %912 = vmatprep.subr.bf16.mxu0 0
          %913 = vmatpush1.bf16.xpose.msra.mxu0 0
          %914 = vmatprep.subr.bf16.mxu0 0
          %915 = vmatpush1.bf16.xpose.msra.mxu0 0
          %916 = vmatprep.subr.bf16.mxu0 0
          %917 = vmatpush1.bf16.xpose.msra.mxu0 0
          %918 = vmatprep.subr.bf16.mxu0 0
          %919 = vmatpush1.bf16.xpose.msra.mxu0 0
          %920 = vmatprep.subr.bf16.mxu0 0
          %921 = vmatpush1.bf16.xpose.msra.mxu0 0
          %922 = vmatprep.subr.bf16.mxu0 0
          %923 = vmatpush1.bf16.xpose.msra.mxu0 0
          %924 = vmatprep.mubr.bf16.mxu0 %v479
          %925 = vmatmul.mubr.bf16.gmra.mrb[0].mxu0 %v478
          %v926 = vpop.f32.mrb[0].mxu0
          %v927 = vadd.f32 %v886, %v926
          %v928 = vpop.f32.mrb[0].mxu0
          %v929 = vpop.f32.mrb[0].mxu0
          %v930 = vadd.f32 %v889, %v929
          %v931 = vpop.f32.mrb[0].mxu0
          %932 = vdwg.mxu0
          %933 = vmatprep.subr.bf16.mxu0 %v689
          %934 = vmatpush1.bf16.xpose.msra.mxu0 %v688
          %935 = vmatprep.subr.bf16.mxu0 %v697
          %936 = vmatpush1.bf16.xpose.msra.mxu0 %v696
          %937 = vmatprep.subr.bf16.mxu0 %v705
          %938 = vmatpush1.bf16.xpose.msra.mxu0 %v704
          %939 = vmatprep.subr.bf16.mxu0 %v713
          %940 = vmatpush1.bf16.xpose.msra.mxu0 %v712
          %941 = vmatprep.subr.bf16.mxu0 %v721
          %942 = vmatpush1.bf16.xpose.msra.mxu0 %v720
          %943 = vmatprep.subr.bf16.mxu0 %v729
          %944 = vmatpush1.bf16.xpose.msra.mxu0 %v728
          %945 = vmatprep.subr.bf16.mxu0 %v737
          %946 = vmatpush1.bf16.xpose.msra.mxu0 %v736
          %947 = vmatprep.subr.bf16.mxu0 %v745
          %948 = vmatpush1.bf16.xpose.msra.mxu0 %v744
          %949 = vmatprep.subr.bf16.mxu0 0
          %950 = vmatpush1.bf16.xpose.msra.mxu0 0
          %951 = vmatprep.subr.bf16.mxu0 0
          %952 = vmatpush1.bf16.xpose.msra.mxu0 0
          %953 = vmatprep.subr.bf16.mxu0 0
          %954 = vmatpush1.bf16.xpose.msra.mxu0 0
          %955 = vmatprep.subr.bf16.mxu0 0
          %956 = vmatpush1.bf16.xpose.msra.mxu0 0
          %957 = vmatprep.subr.bf16.mxu0 0
          %958 = vmatpush1.bf16.xpose.msra.mxu0 0
          %959 = vmatprep.subr.bf16.mxu0 0
          %960 = vmatpush1.bf16.xpose.msra.mxu0 0
          %961 = vmatprep.subr.bf16.mxu0 0
          %962 = vmatpush1.bf16.xpose.msra.mxu0 0
          %963 = vmatprep.subr.bf16.mxu0 0
          %964 = vmatpush1.bf16.xpose.msra.mxu0 0
          %965 = vmatprep.mubr.bf16.mxu0 %v481
          %966 = vmatmul.mubr.bf16.gmra.mrb[0].mxu0 %v480
          %v967 = vpop.f32.mrb[0].mxu0
          %v968 = vadd.f32 %v927, %v967
          %v969 = vpop.f32.mrb[0].mxu0
          %v970 = vpop.f32.mrb[0].mxu0
          %v971 = vadd.f32 %v930, %v970
          %v972 = vpop.f32.mrb[0].mxu0
          %973 = vdwg.mxu0
          %v974 = vadd.f32 %v376, %v968
          %v975 = vadd.f32 %v377, %v971
          %976 = vst [vmem:[#allocation2] sm:$0xff] %v974
          %977 = vst [vmem:[#allocation2 + $0x8] sm:$0xff] %v975
        $region56: #{tpu_custom_call.1} parent=43 // pred_fallthru
          _
        %p978 = scmp.eq.s32.totalorder %s31, 1
        // Predicated region
        $region61: #{tpu_custom_call.1} parent=43 // pred_check
          %p979 = pneg %p978
        $region62: #{tpu_custom_call.1} parent=43 // pred_check_branch
          %981 = sbr.rel (%p979) target = $region64
        $region63: #{tpu_custom_call.1} parent=43 // pred_region
          %p982 = scmp.eq.s32.totalorder %s32, 0
          // Predicated region
          $region65: #{tpu_custom_call.1} parent=63 // pred_check
            %p983 = pneg %p982
          $region66: #{tpu_custom_call.1} parent=63 // pred_check_branch
            %985 = sbr.rel (%p983) target = $region68
          $region67: #{tpu_custom_call.1} parent=63 // pred_region
            %v986 = vld [vmem:[%s348] sm:$0xff]
            %v987 = vld [vmem:[%s348 + $0x8] sm:$0xff]
            %v988 = vlaneseq
            %v989 = vand.u32 %v988, 127
            %990 = vset.pattern.permute.xlu0 0
            %991 = vperm.xlu0 %990, %v986
            %v992 = vpop.permute.xlu0 %991
            %993 = vset.pattern.permute.xlu0 0
            %994 = vperm.xlu0 %993, %v987
            %v995 = vpop.permute.xlu0 %994
            %vm996 = vcmp.eq.s32.totalorder %v989, %v992
            %vm997 = vcmp.eq.s32.totalorder %v989, %v995
            %v998 = vsel %vm996, 1.0, 0.0
            %v999 = vsel %vm997, 1.0, 0.0
            %v1000 = vpack.c.bf16 %v999, %v998
            %v1001 = vld [vmem:[%s4] sm:$0xf]
            %v1002 = vld [vmem:[%s4 + $0x4] sm:$0xf]
            %v1005 = vunpack.c.l.b16 %v1001
            %v1006 = vunpack.c.l.b16 %v1002
            %v1007 = vpack.c.b16 %v1006, %v1005
            %vm1009 = vcmask 130048
            %v1011 = vsel %vm1009, %v1000, 0
            %1013 = vmatprep.subr.bf16.mxu0 0
            %1014 = vmatpush1.bf16.msra.mxu0 %v1007
            %1015 = vmatprep.subr.bf16.mxu0 0
            %1016 = vmatpush1.bf16.msra.mxu0 0
            %1017 = vmatprep.subr.bf16.mxu0 0
            %1018 = vmatpush1.bf16.msra.mxu0 0
            %1019 = vmatprep.subr.bf16.mxu0 0
            %1020 = vmatpush1.bf16.msra.mxu0 0
            %1021 = vmatprep.subr.bf16.mxu0 0
            %1022 = vmatpush1.bf16.msra.mxu0 0
            %1023 = vmatprep.subr.bf16.mxu0 0
            %1024 = vmatpush1.bf16.msra.mxu0 0
            %1025 = vmatprep.subr.bf16.mxu0 0
            %1026 = vmatpush1.bf16.msra.mxu0 0
            %1027 = vmatprep.subr.bf16.mxu0 0
            %1028 = vmatpush1.bf16.msra.mxu0 0
            %1029 = vmatprep.subr.bf16.mxu0 0
            %1030 = vmatpush1.bf16.msra.mxu0 0
            %1031 = vmatprep.subr.bf16.mxu0 0
            %1032 = vmatpush1.bf16.msra.mxu0 0
            %1033 = vmatprep.subr.bf16.mxu0 0
            %1034 = vmatpush1.bf16.msra.mxu0 0
            %1035 = vmatprep.subr.bf16.mxu0 0
            %1036 = vmatpush1.bf16.msra.mxu0 0
            %1037 = vmatprep.subr.bf16.mxu0 0
            %1038 = vmatpush1.bf16.msra.mxu0 0
            %1039 = vmatprep.subr.bf16.mxu0 0
            %1040 = vmatpush1.bf16.msra.mxu0 0
            %1041 = vmatprep.subr.bf16.mxu0 0
            %1042 = vmatpush1.bf16.msra.mxu0 0
            %1043 = vmatprep.subr.bf16.mxu0 0
            %1044 = vmatpush1.bf16.msra.mxu0 0
            %1045 = vmatprep.mubr.bf16.mxu0 0
            %1046 = vmatmul.mubr.bf16.gmra.mrb[0].mxu0 %v1011
            %v1047 = vpop.f32.mrb[0].mxu0
            %v1048 = vadd.f32 0.0, %v1047
            %v1049 = vpop.f32.mrb[0].mxu0
            %v1050 = vpop.f32.mrb[0].mxu0
            %v1051 = vadd.f32 0.0, %v1050
            %v1052 = vpop.f32.mrb[0].mxu0
            %1053 = vdwg.mxu0
            %s1054 = sld [smem:[#allocation4]]
            %s1055 = smul.f32 %s1054, 19.9
            %s1056 = sadd.f32 %s1055, 0.1
            %s1057 = smul.f32 %s1056, -0.5
            %v1058 = vld [vmem:[#allocation2] sm:$0xff]
            %v1059 = vld [vmem:[#allocation2 + $0x8] sm:$0xff]
            %vm1060 = vcmp.gt.f32.partialorder %v1058, 0.0
            %vm1061 = vcmp.gt.f32.partialorder %v1059, 0.0
            %v1062 = vstv %s1057
            %v1063 = vmul.f32 %v1062, %v1048
            %v1064 = vmul.f32 %v1062, %v1051
            %v1065 = vsel %vm1060, %v1063, 0.0
            %v1066 = vsel %vm1061, %v1064, 0.0
            %v1067 = vpack.c.bf16 %v1066, %v1065
            %1068 = vst [vmem:[#allocation3] sm:$0xff] %v1067
          $region68: #{tpu_custom_call.1} parent=63 // pred_fallthru
            _
          %v1069 = vld [vmem:[#allocation3] sm:$0xff]
          %v1070 = vld [vmem:[#allocation8] sm:$0xff]
          %v1071 = vld [vmem:[#allocation8 + $0x8] sm:$0xff]
          %v1072 = vld [vmem:[#allocation8 + $0x10] sm:$0xff]
          %v1073 = vld [vmem:[#allocation8 + $0x18] sm:$0xff]
          %v1074 = vld [vmem:[#allocation8 + $0x20] sm:$0xff]
          %v1075 = vld [vmem:[#allocation8 + $0x28] sm:$0xff]
          %v1076 = vld [vmem:[#allocation8 + $0x30] sm:$0xff]
          %v1077 = vld [vmem:[#allocation8 + $0x38] sm:$0xff]
          %v1078 = vld [vmem:[#allocation8 + $0x40] sm:$0xff]
          %v1079 = vld [vmem:[#allocation8 + $0x48] sm:$0xff]
          %v1080 = vld [vmem:[#allocation8 + $0x50] sm:$0xff]
          %v1081 = vld [vmem:[#allocation8 + $0x58] sm:$0xff]
          %v1082 = vld [vmem:[#allocation8 + $0x60] sm:$0xff]
          %v1083 = vld [vmem:[#allocation8 + $0x68] sm:$0xff]
          %v1084 = vld [vmem:[#allocation8 + $0x70] sm:$0xff]
          %v1085 = vld [vmem:[#allocation8 + $0x78] sm:$0xff]
          %v1086 = vld [vmem:[#allocation8 + $0x80] sm:$0xff]
          %v1087 = vld [vmem:[#allocation8 + $0x88] sm:$0xff]
          %v1088 = vld [vmem:[#allocation8 + $0x90] sm:$0xff]
          %v1089 = vld [vmem:[#allocation8 + $0x98] sm:$0xff]
          %v1090 = vld [vmem:[#allocation8 + $0xa0] sm:$0xff]
          %v1091 = vld [vmem:[#allocation8 + $0xa8] sm:$0xff]
          %v1092 = vld [vmem:[#allocation8 + $0xb0] sm:$0xff]
          %v1093 = vld [vmem:[#allocation8 + $0xb8] sm:$0xff]
          %v1094 = vld [vmem:[#allocation8 + $0xc0] sm:$0xff]
          %v1095 = vld [vmem:[#allocation8 + $0xc8] sm:$0xff]
          %v1096 = vld [vmem:[#allocation8 + $0xd0] sm:$0xff]
          %v1097 = vld [vmem:[#allocation8 + $0xd8] sm:$0xff]
          %v1098 = vld [vmem:[#allocation8 + $0xe0] sm:$0xff]
          %v1099 = vld [vmem:[#allocation8 + $0xe8] sm:$0xff]
          %v1100 = vld [vmem:[#allocation8 + $0xf0] sm:$0xff]
          %v1101 = vld [vmem:[#allocation8 + $0xf8] sm:$0xff]
          %v1102 = vld [vmem:[#allocation8 + $0x100] sm:$0xff]
          %v1103 = vld [vmem:[#allocation8 + $0x108] sm:$0xff]
          %v1104 = vld [vmem:[#allocation8 + $0x110] sm:$0xff]
          %v1105 = vld [vmem:[#allocation8 + $0x118] sm:$0xff]
          %v1106 = vld [vmem:[#allocation8 + $0x120] sm:$0xff]
          %v1107 = vld [vmem:[#allocation8 + $0x128] sm:$0xff]
          %v1108 = vld [vmem:[#allocation8 + $0x130] sm:$0xff]
          %v1109 = vld [vmem:[#allocation8 + $0x138] sm:$0xff]
          %v1110 = vld [vmem:[#allocation8 + $0x140] sm:$0xff]
          %v1111 = vld [vmem:[#allocation8 + $0x148] sm:$0xff]
          %v1112 = vld [vmem:[#allocation8 + $0x150] sm:$0xff]
          %v1113 = vld [vmem:[#allocation8 + $0x158] sm:$0xff]
          %v1114 = vld [vmem:[#allocation8 + $0x160] sm:$0xff]
          %v1115 = vld [vmem:[#allocation8 + $0x168] sm:$0xff]
          %v1116 = vld [vmem:[#allocation8 + $0x170] sm:$0xff]
          %v1117 = vld [vmem:[#allocation8 + $0x178] sm:$0xff]
          %v1118 = vld [vmem:[#allocation8 + $0x180] sm:$0xff]
          %v1119 = vld [vmem:[#allocation8 + $0x188] sm:$0xff]
          %v1120 = vld [vmem:[#allocation8 + $0x190] sm:$0xff]
          %v1121 = vld [vmem:[#allocation8 + $0x198] sm:$0xff]
          %v1122 = vld [vmem:[#allocation8 + $0x1a0] sm:$0xff]
          %v1123 = vld [vmem:[#allocation8 + $0x1a8] sm:$0xff]
          %v1124 = vld [vmem:[#allocation8 + $0x1b0] sm:$0xff]
          %v1125 = vld [vmem:[#allocation8 + $0x1b8] sm:$0xff]
          %v1126 = vld [vmem:[#allocation8 + $0x1c0] sm:$0xff]
          %v1127 = vld [vmem:[#allocation8 + $0x1c8] sm:$0xff]
          %v1128 = vld [vmem:[#allocation8 + $0x1d0] sm:$0xff]
          %v1129 = vld [vmem:[#allocation8 + $0x1d8] sm:$0xff]
          %v1130 = vld [vmem:[#allocation8 + $0x1e0] sm:$0xff]
          %v1131 = vld [vmem:[#allocation8 + $0x1e8] sm:$0xff]
          %v1132 = vld [vmem:[#allocation8 + $0x1f0] sm:$0xff]
          %v1133 = vld [vmem:[#allocation8 + $0x1f8] sm:$0xff]
          %v1198 = vunpack.c.l.b16 %v1070
          %v1199 = vunpack.c.h.b16 %v1070
          %v1200 = vunpack.c.l.b16 %v1071
          %v1201 = vunpack.c.h.b16 %v1071
          %v1202 = vunpack.c.l.b16 %v1072
          %v1203 = vunpack.c.h.b16 %v1072
          %v1204 = vunpack.c.l.b16 %v1073
          %v1205 = vunpack.c.h.b16 %v1073
          %v1206 = vunpack.c.l.b16 %v1074
          %v1207 = vunpack.c.h.b16 %v1074
          %v1208 = vunpack.c.l.b16 %v1075
          %v1209 = vunpack.c.h.b16 %v1075
          %v1210 = vunpack.c.l.b16 %v1076
          %v1211 = vunpack.c.h.b16 %v1076
          %v1212 = vunpack.c.l.b16 %v1077
          %v1213 = vunpack.c.h.b16 %v1077
          %v1214 = vunpack.c.l.b16 %v1078
          %v1215 = vunpack.c.h.b16 %v1078
          %v1216 = vunpack.c.l.b16 %v1079
          %v1217 = vunpack.c.h.b16 %v1079
          %v1218 = vunpack.c.l.b16 %v1080
          %v1219 = vunpack.c.h.b16 %v1080
          %v1220 = vunpack.c.l.b16 %v1081
          %v1221 = vunpack.c.h.b16 %v1081
          %v1222 = vunpack.c.l.b16 %v1082
          %v1223 = vunpack.c.h.b16 %v1082
          %v1224 = vunpack.c.l.b16 %v1083
          %v1225 = vunpack.c.h.b16 %v1083
          %v1226 = vunpack.c.l.b16 %v1084
          %v1227 = vunpack.c.h.b16 %v1084
          %v1228 = vunpack.c.l.b16 %v1085
          %v1229 = vunpack.c.h.b16 %v1085
          %v1230 = vunpack.c.l.b16 %v1086
          %v1231 = vunpack.c.h.b16 %v1086
          %v1232 = vunpack.c.l.b16 %v1087
          %v1233 = vunpack.c.h.b16 %v1087
          %v1234 = vunpack.c.l.b16 %v1088
          %v1235 = vunpack.c.h.b16 %v1088
          %v1236 = vunpack.c.l.b16 %v1089
          %v1237 = vunpack.c.h.b16 %v1089
          %v1238 = vunpack.c.l.b16 %v1090
          %v1239 = vunpack.c.h.b16 %v1090
          %v1240 = vunpack.c.l.b16 %v1091
          %v1241 = vunpack.c.h.b16 %v1091
          %v1242 = vunpack.c.l.b16 %v1092
          %v1243 = vunpack.c.h.b16 %v1092
          %v1244 = vunpack.c.l.b16 %v1093
          %v1245 = vunpack.c.h.b16 %v1093
          %v1246 = vunpack.c.l.b16 %v1094
          %v1247 = vunpack.c.h.b16 %v1094
          %v1248 = vunpack.c.l.b16 %v1095
          %v1249 = vunpack.c.h.b16 %v1095
          %v1250 = vunpack.c.l.b16 %v1096
          %v1251 = vunpack.c.h.b16 %v1096
          %v1252 = vunpack.c.l.b16 %v1097
          %v1253 = vunpack.c.h.b16 %v1097
          %v1254 = vunpack.c.l.b16 %v1098
          %v1255 = vunpack.c.h.b16 %v1098
          %v1256 = vunpack.c.l.b16 %v1099
          %v1257 = vunpack.c.h.b16 %v1099
          %v1258 = vunpack.c.l.b16 %v1100
          %v1259 = vunpack.c.h.b16 %v1100
          %v1260 = vunpack.c.l.b16 %v1101
          %v1261 = vunpack.c.h.b16 %v1101
          %v1262 = vunpack.c.l.b16 %v1102
          %v1263 = vunpack.c.h.b16 %v1102
          %v1264 = vunpack.c.l.b16 %v1103
          %v1265 = vunpack.c.h.b16 %v1103
          %v1266 = vunpack.c.l.b16 %v1104
          %v1267 = vunpack.c.h.b16 %v1104
          %v1268 = vunpack.c.l.b16 %v1105
          %v1269 = vunpack.c.h.b16 %v1105
          %v1270 = vunpack.c.l.b16 %v1106
          %v1271 = vunpack.c.h.b16 %v1106
          %v1272 = vunpack.c.l.b16 %v1107
          %v1273 = vunpack.c.h.b16 %v1107
          %v1274 = vunpack.c.l.b16 %v1108
          %v1275 = vunpack.c.h.b16 %v1108
          %v1276 = vunpack.c.l.b16 %v1109
          %v1277 = vunpack.c.h.b16 %v1109
          %v1278 = vunpack.c.l.b16 %v1110
          %v1279 = vunpack.c.h.b16 %v1110
          %v1280 = vunpack.c.l.b16 %v1111
          %v1281 = vunpack.c.h.b16 %v1111
          %v1282 = vunpack.c.l.b16 %v1112
          %v1283 = vunpack.c.h.b16 %v1112
          %v1284 = vunpack.c.l.b16 %v1113
          %v1285 = vunpack.c.h.b16 %v1113
          %v1286 = vunpack.c.l.b16 %v1114
          %v1287 = vunpack.c.h.b16 %v1114
          %v1288 = vunpack.c.l.b16 %v1115
          %v1289 = vunpack.c.h.b16 %v1115
          %v1290 = vunpack.c.l.b16 %v1116
          %v1291 = vunpack.c.h.b16 %v1116
          %v1292 = vunpack.c.l.b16 %v1117
          %v1293 = vunpack.c.h.b16 %v1117
          %v1294 = vunpack.c.l.b16 %v1118
          %v1295 = vunpack.c.h.b16 %v1118
          %v1296 = vunpack.c.l.b16 %v1119
          %v1297 = vunpack.c.h.b16 %v1119
          %v1298 = vunpack.c.l.b16 %v1120
          %v1299 = vunpack.c.h.b16 %v1120
          %v1300 = vunpack.c.l.b16 %v1121
          %v1301 = vunpack.c.h.b16 %v1121
          %v1302 = vunpack.c.l.b16 %v1122
          %v1303 = vunpack.c.h.b16 %v1122
          %v1304 = vunpack.c.l.b16 %v1123
          %v1305 = vunpack.c.h.b16 %v1123
          %v1306 = vunpack.c.l.b16 %v1124
          %v1307 = vunpack.c.h.b16 %v1124
          %v1308 = vunpack.c.l.b16 %v1125
          %v1309 = vunpack.c.h.b16 %v1125
          %v1310 = vunpack.c.l.b16 %v1126
          %v1311 = vunpack.c.h.b16 %v1126
          %v1312 = vunpack.c.l.b16 %v1127
          %v1313 = vunpack.c.h.b16 %v1127
          %v1314 = vunpack.c.l.b16 %v1128
          %v1315 = vunpack.c.h.b16 %v1128
          %v1316 = vunpack.c.l.b16 %v1129
          %v1317 = vunpack.c.h.b16 %v1129
          %v1318 = vunpack.c.l.b16 %v1130
          %v1319 = vunpack.c.h.b16 %v1130
          %v1320 = vunpack.c.l.b16 %v1131
          %v1321 = vunpack.c.h.b16 %v1131
          %v1322 = vunpack.c.l.b16 %v1132
          %v1323 = vunpack.c.h.b16 %v1132
          %v1324 = vunpack.c.l.b16 %v1133
          %v1325 = vunpack.c.h.b16 %v1133
          %v1326 = vpack.c.b16 %v1206, %v1198
          %v1327 = vpack.c.b16 %v1207, %v1199
          %v1328 = vpack.c.b16 %v1208, %v1200
          %v1329 = vpack.c.b16 %v1209, %v1201
          %v1330 = vpack.c.b16 %v1210, %v1202
          %v1331 = vpack.c.b16 %v1211, %v1203
          %v1332 = vpack.c.b16 %v1212, %v1204
          %v1333 = vpack.c.b16 %v1213, %v1205
          %v1334 = vpack.c.b16 %v1222, %v1214
          %v1335 = vpack.c.b16 %v1223, %v1215
          %v1336 = vpack.c.b16 %v1224, %v1216
          %v1337 = vpack.c.b16 %v1225, %v1217
          %v1338 = vpack.c.b16 %v1226, %v1218
          %v1339 = vpack.c.b16 %v1227, %v1219
          %v1340 = vpack.c.b16 %v1228, %v1220
          %v1341 = vpack.c.b16 %v1229, %v1221
          %v1342 = vpack.c.b16 %v1238, %v1230
          %v1343 = vpack.c.b16 %v1239, %v1231
          %v1344 = vpack.c.b16 %v1240, %v1232
          %v1345 = vpack.c.b16 %v1241, %v1233
          %v1346 = vpack.c.b16 %v1242, %v1234
          %v1347 = vpack.c.b16 %v1243, %v1235
          %v1348 = vpack.c.b16 %v1244, %v1236
          %v1349 = vpack.c.b16 %v1245, %v1237
          %v1350 = vpack.c.b16 %v1254, %v1246
          %v1351 = vpack.c.b16 %v1255, %v1247
          %v1352 = vpack.c.b16 %v1256, %v1248
          %v1353 = vpack.c.b16 %v1257, %v1249
          %v1354 = vpack.c.b16 %v1258, %v1250
          %v1355 = vpack.c.b16 %v1259, %v1251
          %v1356 = vpack.c.b16 %v1260, %v1252
          %v1357 = vpack.c.b16 %v1261, %v1253
          %v1358 = vpack.c.b16 %v1270, %v1262
          %v1359 = vpack.c.b16 %v1271, %v1263
          %v1360 = vpack.c.b16 %v1272, %v1264
          %v1361 = vpack.c.b16 %v1273, %v1265
          %v1362 = vpack.c.b16 %v1274, %v1266
          %v1363 = vpack.c.b16 %v1275, %v1267
          %v1364 = vpack.c.b16 %v1276, %v1268
          %v1365 = vpack.c.b16 %v1277, %v1269
          %v1366 = vpack.c.b16 %v1286, %v1278
          %v1367 = vpack.c.b16 %v1287, %v1279
          %v1368 = vpack.c.b16 %v1288, %v1280
          %v1369 = vpack.c.b16 %v1289, %v1281
          %v1370 = vpack.c.b16 %v1290, %v1282
          %v1371 = vpack.c.b16 %v1291, %v1283
          %v1372 = vpack.c.b16 %v1292, %v1284
          %v1373 = vpack.c.b16 %v1293, %v1285
          %v1374 = vpack.c.b16 %v1302, %v1294
          %v1375 = vpack.c.b16 %v1303, %v1295
          %v1376 = vpack.c.b16 %v1304, %v1296
          %v1377 = vpack.c.b16 %v1305, %v1297
          %v1378 = vpack.c.b16 %v1306, %v1298
          %v1379 = vpack.c.b16 %v1307, %v1299
          %v1380 = vpack.c.b16 %v1308, %v1300
          %v1381 = vpack.c.b16 %v1309, %v1301
          %v1382 = vpack.c.b16 %v1318, %v1310
          %v1383 = vpack.c.b16 %v1319, %v1311
          %v1384 = vpack.c.b16 %v1320, %v1312
          %v1385 = vpack.c.b16 %v1321, %v1313
          %v1386 = vpack.c.b16 %v1322, %v1314
          %v1387 = vpack.c.b16 %v1323, %v1315
          %v1388 = vpack.c.b16 %v1324, %v1316
          %v1389 = vpack.c.b16 %v1325, %v1317
          %1454 = vmatprep.subr.bf16.mxu0 %v1327
          %1455 = vmatpush1.bf16.msra.mxu0 %v1326
          %1456 = vmatprep.subr.bf16.mxu0 %v1335
          %1457 = vmatpush1.bf16.msra.mxu0 %v1334
          %1458 = vmatprep.subr.bf16.mxu0 %v1343
          %1459 = vmatpush1.bf16.msra.mxu0 %v1342
          %1460 = vmatprep.subr.bf16.mxu0 %v1351
          %1461 = vmatpush1.bf16.msra.mxu0 %v1350
          %1462 = vmatprep.subr.bf16.mxu0 %v1359
          %1463 = vmatpush1.bf16.msra.mxu0 %v1358
          %1464 = vmatprep.subr.bf16.mxu0 %v1367
          %1465 = vmatpush1.bf16.msra.mxu0 %v1366
          %1466 = vmatprep.subr.bf16.mxu0 %v1375
          %1467 = vmatpush1.bf16.msra.mxu0 %v1374
          %1468 = vmatprep.subr.bf16.mxu0 %v1383
          %1469 = vmatpush1.bf16.msra.mxu0 %v1382
          %1470 = vmatprep.subr.bf16.mxu0 0
          %1471 = vmatpush1.bf16.msra.mxu0 0
          %1472 = vmatprep.subr.bf16.mxu0 0
          %1473 = vmatpush1.bf16.msra.mxu0 0
          %1474 = vmatprep.subr.bf16.mxu0 0
          %1475 = vmatpush1.bf16.msra.mxu0 0
          %1476 = vmatprep.subr.bf16.mxu0 0
          %1477 = vmatpush1.bf16.msra.mxu0 0
          %1478 = vmatprep.subr.bf16.mxu0 0
          %1479 = vmatpush1.bf16.msra.mxu0 0
          %1480 = vmatprep.subr.bf16.mxu0 0
          %1481 = vmatpush1.bf16.msra.mxu0 0
          %1482 = vmatprep.subr.bf16.mxu0 0
          %1483 = vmatpush1.bf16.msra.mxu0 0
          %1484 = vmatprep.subr.bf16.mxu0 0
          %1485 = vmatpush1.bf16.msra.mxu0 0
          %1486 = vmatprep.mubr.bf16.mxu0 0
          %1487 = vmatmul.mubr.bf16.gmra.mrb[0].mxu0 %v1069
          %v1488 = vpop.f32.mrb[0].mxu0
          %v1489 = vadd.f32 0.0, %v1488
          %v1490 = vpop.f32.mrb[0].mxu0
          %v1491 = vadd.f32 0.0, %v1490
          %v1492 = vpop.f32.mrb[0].mxu0
          %v1493 = vadd.f32 0.0, %v1492
          %v1494 = vpop.f32.mrb[0].mxu0
          %v1495 = vadd.f32 0.0, %v1494
          %1496 = vdwg.mxu0
          %1497 = vmatprep.subr.bf16.mxu0 %v1329
          %1498 = vmatpush1.bf16.msra.mxu0 %v1328
          %1499 = vmatprep.subr.bf16.mxu0 %v1337
          %1500 = vmatpush1.bf16.msra.mxu0 %v1336
          %1501 = vmatprep.subr.bf16.mxu0 %v1345
          %1502 = vmatpush1.bf16.msra.mxu0 %v1344
          %1503 = vmatprep.subr.bf16.mxu0 %v1353
          %1504 = vmatpush1.bf16.msra.mxu0 %v1352
          %1505 = vmatprep.subr.bf16.mxu0 %v1361
          %1506 = vmatpush1.bf16.msra.mxu0 %v1360
          %1507 = vmatprep.subr.bf16.mxu0 %v1369
          %1508 = vmatpush1.bf16.msra.mxu0 %v1368
          %1509 = vmatprep.subr.bf16.mxu0 %v1377
          %1510 = vmatpush1.bf16.msra.mxu0 %v1376
          %1511 = vmatprep.subr.bf16.mxu0 %v1385
          %1512 = vmatpush1.bf16.msra.mxu0 %v1384
          %1513 = vmatprep.subr.bf16.mxu0 0
          %1514 = vmatpush1.bf16.msra.mxu0 0
          %1515 = vmatprep.subr.bf16.mxu0 0
          %1516 = vmatpush1.bf16.msra.mxu0 0
          %1517 = vmatprep.subr.bf16.mxu0 0
          %1518 = vmatpush1.bf16.msra.mxu0 0
          %1519 = vmatprep.subr.bf16.mxu0 0
          %1520 = vmatpush1.bf16.msra.mxu0 0
          %1521 = vmatprep.subr.bf16.mxu0 0
          %1522 = vmatpush1.bf16.msra.mxu0 0
          %1523 = vmatprep.subr.bf16.mxu0 0
          %1524 = vmatpush1.bf16.msra.mxu0 0
          %1525 = vmatprep.subr.bf16.mxu0 0
          %1526 = vmatpush1.bf16.msra.mxu0 0
          %1527 = vmatprep.subr.bf16.mxu0 0
          %1528 = vmatpush1.bf16.msra.mxu0 0
          %1529 = vmatprep.mubr.bf16.mxu0 0
          %1530 = vmatmul.mubr.bf16.gmra.mrb[0].mxu0 %v1069
          %v1531 = vpop.f32.mrb[0].mxu0
          %v1532 = vadd.f32 0.0, %v1531
          %v1533 = vpop.f32.mrb[0].mxu0
          %v1534 = vadd.f32 0.0, %v1533
          %v1535 = vpop.f32.mrb[0].mxu0
          %v1536 = vadd.f32 0.0, %v1535
          %v1537 = vpop.f32.mrb[0].mxu0
          %v1538 = vadd.f32 0.0, %v1537
          %1539 = vdwg.mxu0
          %1540 = vmatprep.subr.bf16.mxu0 %v1331
          %1541 = vmatpush1.bf16.msra.mxu0 %v1330
          %1542 = vmatprep.subr.bf16.mxu0 %v1339
          %1543 = vmatpush1.bf16.msra.mxu0 %v1338
          %1544 = vmatprep.subr.bf16.mxu0 %v1347
          %1545 = vmatpush1.bf16.msra.mxu0 %v1346
          %1546 = vmatprep.subr.bf16.mxu0 %v1355
          %1547 = vmatpush1.bf16.msra.mxu0 %v1354
          %1548 = vmatprep.subr.bf16.mxu0 %v1363
          %1549 = vmatpush1.bf16.msra.mxu0 %v1362
          %1550 = vmatprep.subr.bf16.mxu0 %v1371
          %1551 = vmatpush1.bf16.msra.mxu0 %v1370
          %1552 = vmatprep.subr.bf16.mxu0 %v1379
          %1553 = vmatpush1.bf16.msra.mxu0 %v1378
          %1554 = vmatprep.subr.bf16.mxu0 %v1387
          %1555 = vmatpush1.bf16.msra.mxu0 %v1386
          %1556 = vmatprep.subr.bf16.mxu0 0
          %1557 = vmatpush1.bf16.msra.mxu0 0
          %1558 = vmatprep.subr.bf16.mxu0 0
          %1559 = vmatpush1.bf16.msra.mxu0 0
          %1560 = vmatprep.subr.bf16.mxu0 0
          %1561 = vmatpush1.bf16.msra.mxu0 0
          %1562 = vmatprep.subr.bf16.mxu0 0
          %1563 = vmatpush1.bf16.msra.mxu0 0
          %1564 = vmatprep.subr.bf16.mxu0 0
          %1565 = vmatpush1.bf16.msra.mxu0 0
          %1566 = vmatprep.subr.bf16.mxu0 0
          %1567 = vmatpush1.bf16.msra.mxu0 0
          %1568 = vmatprep.subr.bf16.mxu0 0
          %1569 = vmatpush1.bf16.msra.mxu0 0
          %1570 = vmatprep.subr.bf16.mxu0 0
          %1571 = vmatpush1.bf16.msra.mxu0 0
          %1572 = vmatprep.mubr.bf16.mxu0 0
          %1573 = vmatmul.mubr.bf16.gmra.mrb[0].mxu0 %v1069
          %v1574 = vpop.f32.mrb[0].mxu0
          %v1575 = vadd.f32 0.0, %v1574
          %v1576 = vpop.f32.mrb[0].mxu0
          %v1577 = vadd.f32 0.0, %v1576
          %v1578 = vpop.f32.mrb[0].mxu0
          %v1579 = vadd.f32 0.0, %v1578
          %v1580 = vpop.f32.mrb[0].mxu0
          %v1581 = vadd.f32 0.0, %v1580
          %1582 = vdwg.mxu0
          %1583 = vmatprep.subr.bf16.mxu0 %v1333
          %1584 = vmatpush1.bf16.msra.mxu0 %v1332
          %1585 = vmatprep.subr.bf16.mxu0 %v1341
          %1586 = vmatpush1.bf16.msra.mxu0 %v1340
          %1587 = vmatprep.subr.bf16.mxu0 %v1349
          %1588 = vmatpush1.bf16.msra.mxu0 %v1348
          %1589 = vmatprep.subr.bf16.mxu0 %v1357
          %1590 = vmatpush1.bf16.msra.mxu0 %v1356
          %1591 = vmatprep.subr.bf16.mxu0 %v1365
          %1592 = vmatpush1.bf16.msra.mxu0 %v1364
          %1593 = vmatprep.subr.bf16.mxu0 %v1373
          %1594 = vmatpush1.bf16.msra.mxu0 %v1372
          %1595 = vmatprep.subr.bf16.mxu0 %v1381
          %1596 = vmatpush1.bf16.msra.mxu0 %v1380
          %1597 = vmatprep.subr.bf16.mxu0 %v1389
          %1598 = vmatpush1.bf16.msra.mxu0 %v1388
          %1599 = vmatprep.subr.bf16.mxu0 0
          %1600 = vmatpush1.bf16.msra.mxu0 0
          %1601 = vmatprep.subr.bf16.mxu0 0
          %1602 = vmatpush1.bf16.msra.mxu0 0
          %1603 = vmatprep.subr.bf16.mxu0 0
          %1604 = vmatpush1.bf16.msra.mxu0 0
          %1605 = vmatprep.subr.bf16.mxu0 0
          %1606 = vmatpush1.bf16.msra.mxu0 0
          %1607 = vmatprep.subr.bf16.mxu0 0
          %1608 = vmatpush1.bf16.msra.mxu0 0
          %1609 = vmatprep.subr.bf16.mxu0 0
          %1610 = vmatpush1.bf16.msra.mxu0 0
          %1611 = vmatprep.subr.bf16.mxu0 0
          %1612 = vmatpush1.bf16.msra.mxu0 0
          %1613 = vmatprep.subr.bf16.mxu0 0
          %1614 = vmatpush1.bf16.msra.mxu0 0
          %1615 = vmatprep.mubr.bf16.mxu0 0
          %1616 = vmatmul.mubr.bf16.gmra.mrb[0].mxu0 %v1069
          %v1617 = vpop.f32.mrb[0].mxu0
          %v1618 = vadd.f32 0.0, %v1617
          %v1619 = vpop.f32.mrb[0].mxu0
          %v1620 = vadd.f32 0.0, %v1619
          %v1621 = vpop.f32.mrb[0].mxu0
          %v1622 = vadd.f32 0.0, %v1621
          %v1623 = vpop.f32.mrb[0].mxu0
          %v1624 = vadd.f32 0.0, %v1623
          %1625 = vdwg.mxu0
          %1626 = vst [vmem:[%s343] sm:$0xff] %v1489
          %1627 = vst [vmem:[%s343 + $0x8] sm:$0xff] %v1491
          %1628 = vst [vmem:[%s343 + $0x10] sm:$0xff] %v1532
          %1629 = vst [vmem:[%s343 + $0x18] sm:$0xff] %v1534
          %1630 = vst [vmem:[%s343 + $0x20] sm:$0xff] %v1575
          %1631 = vst [vmem:[%s343 + $0x28] sm:$0xff] %v1577
          %1632 = vst [vmem:[%s343 + $0x30] sm:$0xff] %v1618
          %1633 = vst [vmem:[%s343 + $0x38] sm:$0xff] %v1620
          %1634 = vst [vmem:[%s343 + $0x40] sm:$0xff] %v1493
          %1635 = vst [vmem:[%s343 + $0x48] sm:$0xff] %v1495
          %1636 = vst [vmem:[%s343 + $0x50] sm:$0xff] %v1536
          %1637 = vst [vmem:[%s343 + $0x58] sm:$0xff] %v1538
          %1638 = vst [vmem:[%s343 + $0x60] sm:$0xff] %v1579
          %1639 = vst [vmem:[%s343 + $0x68] sm:$0xff] %v1581
          %1640 = vst [vmem:[%s343 + $0x70] sm:$0xff] %v1622
          %1641 = vst [vmem:[%s343 + $0x78] sm:$0xff] %v1624
        $region64: #{tpu_custom_call.1} parent=43 // pred_fallthru
          _
        %s1642 = sand.u32 %s203, 1
        %s1643 = scalar_lea.sflag [#allocation7], %s1642
        %s1644 = sand.u32 %s203, 1
        %s1645 = smul.addr %s1644, 128
        %s1646 = scalar_lea.vmem [#allocation10], %s1645
        // Predicated region
        $region69: #{tpu_custom_call.1} parent=43 // pred_check
          %p1647 = pneg %p213
        $region70: #{tpu_custom_call.1} parent=43 // pred_check_branch
          %1649 = sbr.rel (%p1647) target = $region72
        $region71: #{tpu_custom_call.1} parent=43 // pred_region
          %s1650 = smul.u32 %s32, %s31
          %s1651 = smul.u32 2, %s30
          %s1652 = smul.u32 8, %s1650
          %s1654 = ssub.s32 2048, 2048
          %1655 = vsyncadd %s1643, %s1654
          %s1656 = smul.addr %s1651, 8
          %s1657 = sadd.s32 %s1652, %s1656
          %s1658 = smul.addr %s1657, 128
          %s1659 = scalar_lea.hbm %s6, %s1658
          %s1660 = sshll.u32 %s1646, 4
          %s1661 = int_to_ptr.vmem [resolvable:$true] %s1660
          %1666 = dma.vmem_to_hbm [thread:$0]  %s1661, 2048, %s1659, %s1643, 1024, 1024, 64
        $region72: #{tpu_custom_call.1} parent=43 // pred_fallthru
          _
      $region44: #{tpu_custom_call.1} parent=5 // pred_fallthru
        _
      %p1667 = scmp.le.s32.totalorder 2, %s20
      // Predicated region
      $region73: #{tpu_custom_call.1} parent=5 // pred_check
        %p1668 = pneg %p1667
      $region74: #{tpu_custom_call.1} parent=5 // pred_check_branch
        %1670 = sbr.rel (%p1668) target = $region76
      $region75: #{tpu_custom_call.1} parent=5 // pred_region
        %s1671 = ssub.s32 %s20, 2
        // Predicated region
        $region77: #{tpu_custom_call.1} parent=75 // pred_check
          %p1672 = pneg %p219
        $region78: #{tpu_custom_call.1} parent=75 // pred_check_branch
          %1674 = sbr.rel (%p1672) target = $region80
        $region79: #{tpu_custom_call.1} parent=75 // pred_region
          %s1675 = sand.u32 %s204, 1
          %s1676 = scalar_lea.sflag [#allocation7], %s1675
          %s1677 = sand.u32 %s204, 1
          %s1678 = smul.addr %s1677, 128
          %s1679 = scalar_lea.vmem [#allocation10], %s1678
          %1680 = dma.done %s1676, 2048
        $region80: #{tpu_custom_call.1} parent=75 // pred_fallthru
          _
      $region76: #{tpu_custom_call.1} parent=5 // pred_fallthru
        _
    $region6: #{tpu_custom_call.1} parent=1 // loop_footer
      %s24 = sadd.s32 1, %s20
    $region7: #{tpu_custom_call.1} parent=1 // loop_footer_branch
      %19 = sbr.rel target = $region3
    $region8: #{tpu_custom_call.1} parent=1 // loop_exit
      _
    %1681 = vsyncpa [#allocation6], 1
    %s1682 = scalar_lea.sflag [#allocation6], 1
    %1683 = vsyncpa %s1682, 1
    %1684 = vsyncpa [#allocation9], 1
    %1685 = vsyncpa [#allocation7], 1
    %s1686 = scalar_lea.sflag [#allocation7], 1
    %1687 = vsyncpa %s1686, 1

</llo_original>
